<compile_context>
chip_gen: v5e
topology: v5e:2x2
jax: 0.10.0
libtpu: 0.0.40
codegen_flags: <defaults>
</compile_context>

<pallas_src>
import math
import functools

import jax
import jax.numpy as jnp
from jax import lax
from jax.experimental import pallas as pl
from jax.experimental.pallas import tpu as pltpu

# ---------------- model hyperparameters (small, consistent with the module) ----------
B = 2          # batch
S = 8          # sequence length
D = 32         # input_dim (embedding dim)
NUM_HEADS = 4
HEAD_DIM = D // NUM_HEADS
LN_EPS = 1e-5
INV_SQRT2 = 1.0 / math.sqrt(2.0)


def _layer_norm(x, gamma, beta):
    mu = jnp.mean(x, axis=-1, keepdims=True)
    var = jnp.mean((x - mu) ** 2, axis=-1, keepdims=True)
    return (x - mu) * lax.rsqrt(var + LN_EPS) * gamma + beta


def _gelu_exact(x):
    # F.gelu default = exact erf-based gelu
    return 0.5 * x * (1.0 + lax.erf(x * INV_SQRT2))


def encoder_layer_kernel(qkv_ref, w_ref, slab_ref, o_ref,
                         *, batch, seq_len, num_heads, head_dim):
    s = seq_len
    d = num_heads * head_dim
    bs = batch * s

    # row-stacked inputs: rows [q (B*S); k (B*S); v (B*S)], all sublane-aligned slices
    x_all = qkv_ref[...]                       # (3*B*S, D) f32
    q_all = x_all[0:bs]                        # residual for AddNorm #1
    k_all = x_all[bs:2 * bs]
    v_all = x_all[2 * bs:3 * bs]

    # pre-transposed, row-stacked weight slab: [wq_t; wk_t; wv_t; wo_t; w1_t; w2_t]
    w = w_ref[...]                             # (6D, D)
    wq_t = w[0:d]
    wk_t = w[d:2 * d]
    wv_t = w[2 * d:3 * d]
    wo_t = w[3 * d:4 * d]
    w1_t = w[4 * d:5 * d]
    w2_t = w[5 * d:6 * d]

    # packed bias / gamma / beta slab: one (16,128) tile, static row slices
    slab = slab_ref[...]
    bq  = slab[0:1, 0:d]
    bk  = slab[1:2, 0:d]
    bv  = slab[2:3, 0:d]
    bo  = slab[3:4, 0:d]
    g1  = slab[4:5, 0:d]
    be1 = slab[5:6, 0:d]
    bf1 = slab[6:7, 0:d]
    bf2 = slab[7:8, 0:d]
    g2  = slab[8:9, 0:d]
    be2 = slab[9:10, 0:d]

    # in-projection: three (B*S, D) @ (D, D) MXU passes; results land in lanes 0:D
    qp = jnp.dot(q_all, wq_t, preferred_element_type=jnp.float32) + bq
    kp = jnp.dot(k_all, wk_t, preferred_element_type=jnp.float32) + bk
    vp = jnp.dot(v_all, wv_t, preferred_element_type=jnp.float32) + bv

    scale = 1.0 / math.sqrt(head_dim)

    # per-batch, per-head attention (tiny, statically unrolled); fold each head's
    # context straight into the output projection -> no VMEM scratch, no concat on lanes
    per_batch = []
    for b in range(batch):
        r0 = b * s
        acc = jnp.zeros((s, d), jnp.float32)
        for h in range(num_heads):
            c0 = h * head_dim
            qh = qp[r0:r0 + s, c0:c0 + head_dim]
            kh = kp[r0:r0 + s, c0:c0 + head_dim]
            vh = vp[r0:r0 + s, c0:c0 + head_dim]
            # qh @ kh^T without an explicit transpose
            sc = lax.dot_general(qh, kh, (((1,), (1,)), ((), ())),
                                 preferred_element_type=jnp.float32) * scale
            sc = sc - jnp.max(sc, axis=-1, keepdims=True)
            p = jnp.exp(sc)
            p = p / jnp.sum(p, axis=-1, keepdims=True)          # exact softmax
            ctx = jnp.dot(p, vh, preferred_element_type=jnp.float32)       # (S, hd)
            # output projection folded in per head (sublane-aligned wo_t row slice)
            acc = acc + jnp.dot(ctx, wo_t[c0:c0 + head_dim],
                                preferred_element_type=jnp.float32)
        per_batch.append(acc)

    # sublane-axis concat at 8-row-aligned boundaries (cheap)
    attn_out = jnp.concatenate(per_batch, axis=0) + bo          # (B*S, D)

    # AddAndNorm after attention: norm(attn_out + dropout(query)); dropout = identity
    x = _layer_norm(attn_out + q_all, g1, be1)

    # PositionWiseFeedForward over all batches at once: Linear -> gelu -> Linear
    h1 = _gelu_exact(jnp.dot(x, w1_t, preferred_element_type=jnp.float32) + bf1)
    ff = jnp.dot(h1, w2_t, preferred_element_type=jnp.float32) + bf2

    # AddAndNorm after feed-forward
    y = _layer_norm(ff + x, g2, be2)

    o_ref[...] = y.astype(o_ref.dtype)


def transformer_encoder_layer(q, k, v, params, num_heads=NUM_HEADS):
    (wqkv, bqkv, wo, bo, g1, be1, w1, bf1, w2, bf2, g2, be2) = params
    b, s, d = q.shape
    head_dim = d // num_heads
    bs = b * s

    # --- wrapper-side packing (one-time, cheap XLA ops) -------------------------------
    # fold batch into rows and stack q, k, v along the row axis -> one input slab
    qkv_rows = jnp.concatenate(
        [q.reshape(bs, d), k.reshape(bs, d), v.reshape(bs, d)],
        axis=0).astype(jnp.float32)                                     # (3*B*S, D)

    # pre-transposed weights, row-stacked into one sublane-aligned slab
    wq, wk, wv = wqkv[0:d], wqkv[d:2 * d], wqkv[2 * d:3 * d]
    w_slab = jnp.concatenate(
        [wq.T, wk.T, wv.T, wo.T, w1.T, w2.T], axis=0).astype(jnp.float32)  # (6D, D)

    # pack the 10 tiny bias/gamma/beta vectors into one (16, 128) f32 slab
    def _row(vec):
        vec = vec.reshape(-1).astype(jnp.float32)
        return jnp.pad(vec, (0, 128 - vec.shape[0]))

    rows = [bqkv[0:d], bqkv[d:2 * d], bqkv[2 * d:3 * d],   # bq, bk, bv
            bo, g1, be1, bf1, bf2, g2, be2]
    slab = jnp.stack([_row(r) for r in rows], axis=0)                   # (10, 128)
    slab = jnp.pad(slab, ((0, 16 - slab.shape[0]), (0, 0)))             # (16, 128)

    kernel = functools.partial(encoder_layer_kernel,
                               batch=b, seq_len=s,
                               num_heads=num_heads, head_dim=head_dim)

    out = pl.pallas_call(
        kernel,
        out_shape=jax.ShapeDtypeStruct((bs, d), jnp.float32),
        grid=(1,),                                            # single step: overhead-bound size
        in_specs=[
            pl.BlockSpec((3 * bs, d), lambda i: (0, 0)),      # stacked q/k/v rows
            pl.BlockSpec((6 * d, d),  lambda i: (0, 0)),      # weight slab
            pl.BlockSpec((16, 128),   lambda i: (0, 0)),      # bias/ln slab
        ],
        out_specs=pl.BlockSpec((bs, d), lambda i: (0, 0)),
        compiler_params=pltpu.CompilerParams(
            dimension_semantics=("arbitrary",)),
    )(qkv_rows, w_slab, slab)

    return out.reshape(b, s, d)


# ---------------- pure-JAX reference (for a numerical sanity check) ------------------
def reference_forward(q, k, v, params, num_heads=NUM_HEADS):
    (wqkv, bqkv, wo, bo, g1, be1, w1, bf1, w2, bf2, g2, be2) = params
    d = q.shape[-1]
    hd = d // num_heads
    wq, wk, wv = wqkv[0:d], wqkv[d:2 * d], wqkv[2 * d:3 * d]
    bq, bk, bv = bqkv[0:d], bqkv[d:2 * d], bqkv[2 * d:3 * d]

    def ln(x, g, b_):
        mu = jnp.mean(x, axis=-1, keepdims=True)
        var = jnp.mean((x - mu) ** 2, axis=-1, keepdims=True)
        return (x - mu) / jnp.sqrt(var + LN_EPS) * g + b_

    qp = q @ wq.T + bq
    kp = k @ wk.T + bk
    vp = v @ wv.T + bv

    def split_heads(x):  # (B,S,D) -> (B,H,S,hd)
        b_, s_, _ = x.shape
        return x.reshape(b_, s_, num_heads, hd).transpose(0, 2, 1, 3)

    qh, kh, vh = split_heads(qp), split_heads(kp), split_heads(vp)
    scores = jnp.einsum("bhqd,bhkd->bhqk", qh, kh) / math.sqrt(hd)
    p = jax.nn.softmax(scores, axis=-1)
    ctx = jnp.einsum("bhqk,bhkd->bhqd", p, vh)
    ctx = ctx.transpose(0, 2, 1, 3).reshape(q.shape)
    attn_out = ctx @ wo.T + bo

    x = ln(attn_out + q, g1, be1)
    h1 = x @ w1.T + bf1
    h1 = 0.5 * h1 * (1.0 + lax.erf(h1 * INV_SQRT2))
    ff = h1 @ w2.T + bf2
    return ln(ff + x, g2, be2)


if __name__ == "__main__":
    key = jax.random.PRNGKey(0)
    keys = jax.random.split(key, 16)

    q = jax.random.normal(keys[0], (B, S, D), jnp.float32)
    k = jax.random.normal(keys[1], (B, S, D), jnp.float32)
    v = jax.random.normal(keys[2], (B, S, D), jnp.float32)

    sc = 0.1
    wqkv = sc * jax.random.normal(keys[3], (3 * D, D), jnp.float32)     # in_proj_weight
    bqkv = sc * jax.random.normal(keys[4], (3 * D,), jnp.float32)       # in_proj_bias
    wo = sc * jax.random.normal(keys[5], (D, D), jnp.float32)           # out_proj.weight
    bo = sc * jax.random.normal(keys[6], (D,), jnp.float32)             # out_proj.bias
    g1 = 1.0 + 0.01 * jax.random.normal(keys[7], (D,), jnp.float32)     # ln1 gamma
    be1 = 0.01 * jax.random.normal(keys[8], (D,), jnp.float32)          # ln1 beta
    w1 = sc * jax.random.normal(keys[9], (D, D), jnp.float32)           # ff layer_1 W
    bf1 = sc * jax.random.normal(keys[10], (D,), jnp.float32)           # ff layer_1 b
    w2 = sc * jax.random.normal(keys[11], (D, D), jnp.float32)          # ff layer_2 W
    bf2 = sc * jax.random.normal(keys[12], (D,), jnp.float32)           # ff layer_2 b
    g2 = 1.0 + 0.01 * jax.random.normal(keys[13], (D,), jnp.float32)    # ln2 gamma
    be2 = 0.01 * jax.random.normal(keys[14], (D,), jnp.float32)         # ln2 beta

    params = (wqkv, bqkv, wo, bo, g1, be1, w1, bf1, w2, bf2, g2, be2)

    # TODO(synk): dropout is treated as identity (eval mode); stateful PRNG dropout not emitted.
    out = transformer_encoder_layer(q, k, v, params)
    out = jax.block_until_ready(out)

    ref = jax.block_until_ready(reference_forward(q, k, v, params))
    assert out.shape == (B, S, D)
    assert bool(jnp.all(jnp.isfinite(out)))
    # exact softmax divide now -> tight tolerance
    assert bool(jnp.max(jnp.abs(out - ref)) < 1e-4), "mismatch vs reference"

    print("KERNEL_OK")
</pallas_src>

<mosaic_0001>
module attributes {stable_mosaic.version = 11 : i64} {
  func.func @encoder_layer_kernel(%arg0: i32, %arg1: memref<48x32xf32, #tpu.memory_space<vmem>>, %arg2: memref<192x32xf32, #tpu.memory_space<vmem>>, %arg3: memref<16x128xf32, #tpu.memory_space<vmem>>, %arg4: memref<16x32xf32, #tpu.memory_space<vmem>>) attributes {dimension_semantics = [#tpu.dimension_semantics<arbitrary>], iteration_bounds = array<i64: 1>, scalar_prefetch = 0 : i64, scratch_operands = 0 : i64, tpu.core_type = #tpu.core_type<tc>, window_params = [{pipeline_mode = #tpu.pipeline_mode<synchronous>, transform_indices = @transform_0, window_bounds = array<i64: 48, 32>}, {pipeline_mode = #tpu.pipeline_mode<synchronous>, transform_indices = @transform_1, window_bounds = array<i64: 192, 32>}, {pipeline_mode = #tpu.pipeline_mode<synchronous>, transform_indices = @transform_2, window_bounds = array<i64: 16, 128>}, {pipeline_mode = #tpu.pipeline_mode<synchronous>, transform_indices = @transform_3, window_bounds = array<i64: 16, 32>}]} {
    %c0 = arith.constant 0 : index
    %c0_0 = arith.constant 0 : index
    %0 = vector.load %arg1[%c0, %c0_0] : memref<48x32xf32, #tpu.memory_space<vmem>>, vector<48x32xf32>
    %1 = vector.extract_strided_slice %0 {offsets = [0, 0], sizes = [16, 32], strides = [1, 1]} : vector<48x32xf32> to vector<16x32xf32>
    %2 = vector.extract_strided_slice %0 {offsets = [16, 0], sizes = [16, 32], strides = [1, 1]} : vector<48x32xf32> to vector<16x32xf32>
    %3 = vector.extract_strided_slice %0 {offsets = [32, 0], sizes = [16, 32], strides = [1, 1]} : vector<48x32xf32> to vector<16x32xf32>
    %c0_1 = arith.constant 0 : index
    %c0_2 = arith.constant 0 : index
    %4 = vector.load %arg2[%c0_1, %c0_2] : memref<192x32xf32, #tpu.memory_space<vmem>>, vector<192x32xf32>
    %5 = vector.extract_strided_slice %4 {offsets = [0, 0], sizes = [32, 32], strides = [1, 1]} : vector<192x32xf32> to vector<32x32xf32>
    %6 = vector.extract_strided_slice %4 {offsets = [32, 0], sizes = [32, 32], strides = [1, 1]} : vector<192x32xf32> to vector<32x32xf32>
    %7 = vector.extract_strided_slice %4 {offsets = [64, 0], sizes = [32, 32], strides = [1, 1]} : vector<192x32xf32> to vector<32x32xf32>
    %8 = vector.extract_strided_slice %4 {offsets = [96, 0], sizes = [32, 32], strides = [1, 1]} : vector<192x32xf32> to vector<32x32xf32>
    %9 = vector.extract_strided_slice %4 {offsets = [128, 0], sizes = [32, 32], strides = [1, 1]} : vector<192x32xf32> to vector<32x32xf32>
    %10 = vector.extract_strided_slice %4 {offsets = [160, 0], sizes = [32, 32], strides = [1, 1]} : vector<192x32xf32> to vector<32x32xf32>
    %c0_3 = arith.constant 0 : index
    %c0_4 = arith.constant 0 : index
    %11 = vector.load %arg3[%c0_3, %c0_4] : memref<16x128xf32, #tpu.memory_space<vmem>>, vector<16x128xf32>
    %12 = vector.extract_strided_slice %11 {offsets = [0, 0], sizes = [1, 32], strides = [1, 1]} : vector<16x128xf32> to vector<1x32xf32>
    %13 = vector.extract_strided_slice %11 {offsets = [1, 0], sizes = [1, 32], strides = [1, 1]} : vector<16x128xf32> to vector<1x32xf32>
    %14 = vector.extract_strided_slice %11 {offsets = [2, 0], sizes = [1, 32], strides = [1, 1]} : vector<16x128xf32> to vector<1x32xf32>
    %15 = vector.extract_strided_slice %11 {offsets = [3, 0], sizes = [1, 32], strides = [1, 1]} : vector<16x128xf32> to vector<1x32xf32>
    %16 = vector.extract_strided_slice %11 {offsets = [4, 0], sizes = [1, 32], strides = [1, 1]} : vector<16x128xf32> to vector<1x32xf32>
    %17 = vector.extract_strided_slice %11 {offsets = [5, 0], sizes = [1, 32], strides = [1, 1]} : vector<16x128xf32> to vector<1x32xf32>
    %18 = vector.extract_strided_slice %11 {offsets = [6, 0], sizes = [1, 32], strides = [1, 1]} : vector<16x128xf32> to vector<1x32xf32>
    %19 = vector.extract_strided_slice %11 {offsets = [7, 0], sizes = [1, 32], strides = [1, 1]} : vector<16x128xf32> to vector<1x32xf32>
    %20 = vector.extract_strided_slice %11 {offsets = [8, 0], sizes = [1, 32], strides = [1, 1]} : vector<16x128xf32> to vector<1x32xf32>
    %21 = vector.extract_strided_slice %11 {offsets = [9, 0], sizes = [1, 32], strides = [1, 1]} : vector<16x128xf32> to vector<1x32xf32>
    %cst = arith.constant dense<0.000000e+00> : vector<16x32xf32>
    %22 = tpu.matmul %1, %5, %cst {dimension_numbers = #tpu.dot_dimension_numbers<[1], [0], [0], [1], [0, 0, 1, 1], [], []>} : vector<16x32xf32>, vector<32x32xf32>, vector<16x32xf32> -> vector<16x32xf32>
    %23 = vector.broadcast %12 : vector<1x32xf32> to vector<16x32xf32>
    %24 = arith.addf %22, %23 : vector<16x32xf32>
    %cst_5 = arith.constant dense<0.000000e+00> : vector<16x32xf32>
    %25 = tpu.matmul %2, %6, %cst_5 {dimension_numbers = #tpu.dot_dimension_numbers<[1], [0], [0], [1], [0, 0, 1, 1], [], []>} : vector<16x32xf32>, vector<32x32xf32>, vector<16x32xf32> -> vector<16x32xf32>
    %26 = vector.broadcast %13 : vector<1x32xf32> to vector<16x32xf32>
    %27 = arith.addf %25, %26 : vector<16x32xf32>
    %cst_6 = arith.constant dense<0.000000e+00> : vector<16x32xf32>
    %28 = tpu.matmul %3, %7, %cst_6 {dimension_numbers = #tpu.dot_dimension_numbers<[1], [0], [0], [1], [0, 0, 1, 1], [], []>} : vector<16x32xf32>, vector<32x32xf32>, vector<16x32xf32> -> vector<16x32xf32>
    %29 = vector.broadcast %14 : vector<1x32xf32> to vector<16x32xf32>
    %30 = arith.addf %28, %29 : vector<16x32xf32>
    %cst_7 = arith.constant 0.000000e+00 : f32
    %31 = vector.broadcast %cst_7 : f32 to vector<8x32xf32>
    %32 = vector.extract_strided_slice %24 {offsets = [0, 0], sizes = [8, 8], strides = [1, 1]} : vector<16x32xf32> to vector<8x8xf32>
    %33 = vector.extract_strided_slice %27 {offsets = [0, 0], sizes = [8, 8], strides = [1, 1]} : vector<16x32xf32> to vector<8x8xf32>
    %34 = vector.extract_strided_slice %30 {offsets = [0, 0], sizes = [8, 8], strides = [1, 1]} : vector<16x32xf32> to vector<8x8xf32>
    %cst_8 = arith.constant dense<0.000000e+00> : vector<8x8xf32>
    %35 = tpu.matmul %32, %33, %cst_8 {dimension_numbers = #tpu.dot_dimension_numbers<[1], [1], [0], [0], [0, 0, 1, 0], [], []>} : vector<8x8xf32>, vector<8x8xf32>, vector<8x8xf32> -> vector<8x8xf32>
    %cst_9 = arith.constant 0.353553385 : f32
    %36 = vector.broadcast %cst_9 : f32 to vector<8x8xf32>
    %37 = arith.mulf %35, %36 : vector<8x8xf32>
    %cst_10 = arith.constant dense<0xFF800000> : vector<8xf32>
    %38 = vector.multi_reduction <maximumf>, %37, %cst_10 [1] : vector<8x8xf32> to vector<8xf32>
    %39 = vector.shape_cast %38 : vector<8xf32> to vector<8x1xf32>
    %40 = vector.broadcast %39 : vector<8x1xf32> to vector<8x8xf32>
    %41 = arith.subf %37, %40 : vector<8x8xf32>
    %42 = math.exp %41 : vector<8x8xf32>
    %cst_11 = arith.constant dense<0.000000e+00> : vector<8xf32>
    %43 = vector.multi_reduction <add>, %42, %cst_11 [1] : vector<8x8xf32> to vector<8xf32>
    %44 = vector.shape_cast %43 : vector<8xf32> to vector<8x1xf32>
    %45 = vector.broadcast %44 : vector<8x1xf32> to vector<8x8xf32>
    %46 = arith.divf %42, %45 : vector<8x8xf32>
    %cst_12 = arith.constant dense<0.000000e+00> : vector<8x8xf32>
    %47 = tpu.matmul %46, %34, %cst_12 {dimension_numbers = #tpu.dot_dimension_numbers<[1], [0], [0], [1], [0, 0, 1, 1], [], []>} : vector<8x8xf32>, vector<8x8xf32>, vector<8x8xf32> -> vector<8x8xf32>
    %48 = vector.extract_strided_slice %8 {offsets = [0, 0], sizes = [8, 32], strides = [1, 1]} : vector<32x32xf32> to vector<8x32xf32>
    %cst_13 = arith.constant dense<0.000000e+00> : vector<8x32xf32>
    %49 = tpu.matmul %47, %48, %cst_13 {dimension_numbers = #tpu.dot_dimension_numbers<[1], [0], [0], [1], [0, 0, 1, 1], [], []>} : vector<8x8xf32>, vector<8x32xf32>, vector<8x32xf32> -> vector<8x32xf32>
    %50 = arith.addf %31, %49 : vector<8x32xf32>
    %51 = vector.extract_strided_slice %24 {offsets = [0, 8], sizes = [8, 8], strides = [1, 1]} : vector<16x32xf32> to vector<8x8xf32>
    %52 = vector.extract_strided_slice %27 {offsets = [0, 8], sizes = [8, 8], strides = [1, 1]} : vector<16x32xf32> to vector<8x8xf32>
    %53 = vector.extract_strided_slice %30 {offsets = [0, 8], sizes = [8, 8], strides = [1, 1]} : vector<16x32xf32> to vector<8x8xf32>
    %cst_14 = arith.constant dense<0.000000e+00> : vector<8x8xf32>
    %54 = tpu.matmul %51, %52, %cst_14 {dimension_numbers = #tpu.dot_dimension_numbers<[1], [1], [0], [0], [0, 0, 1, 0], [], []>} : vector<8x8xf32>, vector<8x8xf32>, vector<8x8xf32> -> vector<8x8xf32>
    %cst_15 = arith.constant 0.353553385 : f32
    %55 = vector.broadcast %cst_15 : f32 to vector<8x8xf32>
    %56 = arith.mulf %54, %55 : vector<8x8xf32>
    %cst_16 = arith.constant dense<0xFF800000> : vector<8xf32>
    %57 = vector.multi_reduction <maximumf>, %56, %cst_16 [1] : vector<8x8xf32> to vector<8xf32>
    %58 = vector.shape_cast %57 : vector<8xf32> to vector<8x1xf32>
    %59 = vector.broadcast %58 : vector<8x1xf32> to vector<8x8xf32>
    %60 = arith.subf %56, %59 : vector<8x8xf32>
    %61 = math.exp %60 : vector<8x8xf32>
    %cst_17 = arith.constant dense<0.000000e+00> : vector<8xf32>
    %62 = vector.multi_reduction <add>, %61, %cst_17 [1] : vector<8x8xf32> to vector<8xf32>
    %63 = vector.shape_cast %62 : vector<8xf32> to vector<8x1xf32>
    %64 = vector.broadcast %63 : vector<8x1xf32> to vector<8x8xf32>
    %65 = arith.divf %61, %64 : vector<8x8xf32>
    %cst_18 = arith.constant dense<0.000000e+00> : vector<8x8xf32>
    %66 = tpu.matmul %65, %53, %cst_18 {dimension_numbers = #tpu.dot_dimension_numbers<[1], [0], [0], [1], [0, 0, 1, 1], [], []>} : vector<8x8xf32>, vector<8x8xf32>, vector<8x8xf32> -> vector<8x8xf32>
    %67 = vector.extract_strided_slice %8 {offsets = [8, 0], sizes = [8, 32], strides = [1, 1]} : vector<32x32xf32> to vector<8x32xf32>
    %cst_19 = arith.constant dense<0.000000e+00> : vector<8x32xf32>
    %68 = tpu.matmul %66, %67, %cst_19 {dimension_numbers = #tpu.dot_dimension_numbers<[1], [0], [0], [1], [0, 0, 1, 1], [], []>} : vector<8x8xf32>, vector<8x32xf32>, vector<8x32xf32> -> vector<8x32xf32>
    %69 = arith.addf %50, %68 : vector<8x32xf32>
    %70 = vector.extract_strided_slice %24 {offsets = [0, 16], sizes = [8, 8], strides = [1, 1]} : vector<16x32xf32> to vector<8x8xf32>
    %71 = vector.extract_strided_slice %27 {offsets = [0, 16], sizes = [8, 8], strides = [1, 1]} : vector<16x32xf32> to vector<8x8xf32>
    %72 = vector.extract_strided_slice %30 {offsets = [0, 16], sizes = [8, 8], strides = [1, 1]} : vector<16x32xf32> to vector<8x8xf32>
    %cst_20 = arith.constant dense<0.000000e+00> : vector<8x8xf32>
    %73 = tpu.matmul %70, %71, %cst_20 {dimension_numbers = #tpu.dot_dimension_numbers<[1], [1], [0], [0], [0, 0, 1, 0], [], []>} : vector<8x8xf32>, vector<8x8xf32>, vector<8x8xf32> -> vector<8x8xf32>
    %cst_21 = arith.constant 0.353553385 : f32
    %74 = vector.broadcast %cst_21 : f32 to vector<8x8xf32>
    %75 = arith.mulf %73, %74 : vector<8x8xf32>
    %cst_22 = arith.constant dense<0xFF800000> : vector<8xf32>
    %76 = vector.multi_reduction <maximumf>, %75, %cst_22 [1] : vector<8x8xf32> to vector<8xf32>
    %77 = vector.shape_cast %76 : vector<8xf32> to vector<8x1xf32>
    %78 = vector.broadcast %77 : vector<8x1xf32> to vector<8x8xf32>
    %79 = arith.subf %75, %78 : vector<8x8xf32>
    %80 = math.exp %79 : vector<8x8xf32>
    %cst_23 = arith.constant dense<0.000000e+00> : vector<8xf32>
    %81 = vector.multi_reduction <add>, %80, %cst_23 [1] : vector<8x8xf32> to vector<8xf32>
    %82 = vector.shape_cast %81 : vector<8xf32> to vector<8x1xf32>
    %83 = vector.broadcast %82 : vector<8x1xf32> to vector<8x8xf32>
    %84 = arith.divf %80, %83 : vector<8x8xf32>
    %cst_24 = arith.constant dense<0.000000e+00> : vector<8x8xf32>
    %85 = tpu.matmul %84, %72, %cst_24 {dimension_numbers = #tpu.dot_dimension_numbers<[1], [0], [0], [1], [0, 0, 1, 1], [], []>} : vector<8x8xf32>, vector<8x8xf32>, vector<8x8xf32> -> vector<8x8xf32>
    %86 = vector.extract_strided_slice %8 {offsets = [16, 0], sizes = [8, 32], strides = [1, 1]} : vector<32x32xf32> to vector<8x32xf32>
    %cst_25 = arith.constant dense<0.000000e+00> : vector<8x32xf32>
    %87 = tpu.matmul %85, %86, %cst_25 {dimension_numbers = #tpu.dot_dimension_numbers<[1], [0], [0], [1], [0, 0, 1, 1], [], []>} : vector<8x8xf32>, vector<8x32xf32>, vector<8x32xf32> -> vector<8x32xf32>
    %88 = arith.addf %69, %87 : vector<8x32xf32>
    %89 = vector.extract_strided_slice %24 {offsets = [0, 24], sizes = [8, 8], strides = [1, 1]} : vector<16x32xf32> to vector<8x8xf32>
    %90 = vector.extract_strided_slice %27 {offsets = [0, 24], sizes = [8, 8], strides = [1, 1]} : vector<16x32xf32> to vector<8x8xf32>
    %91 = vector.extract_strided_slice %30 {offsets = [0, 24], sizes = [8, 8], strides = [1, 1]} : vector<16x32xf32> to vector<8x8xf32>
    %cst_26 = arith.constant dense<0.000000e+00> : vector<8x8xf32>
    %92 = tpu.matmul %89, %90, %cst_26 {dimension_numbers = #tpu.dot_dimension_numbers<[1], [1], [0], [0], [0, 0, 1, 0], [], []>} : vector<8x8xf32>, vector<8x8xf32>, vector<8x8xf32> -> vector<8x8xf32>
    %cst_27 = arith.constant 0.353553385 : f32
    %93 = vector.broadcast %cst_27 : f32 to vector<8x8xf32>
    %94 = arith.mulf %92, %93 : vector<8x8xf32>
    %cst_28 = arith.constant dense<0xFF800000> : vector<8xf32>
    %95 = vector.multi_reduction <maximumf>, %94, %cst_28 [1] : vector<8x8xf32> to vector<8xf32>
    %96 = vector.shape_cast %95 : vector<8xf32> to vector<8x1xf32>
    %97 = vector.broadcast %96 : vector<8x1xf32> to vector<8x8xf32>
    %98 = arith.subf %94, %97 : vector<8x8xf32>
    %99 = math.exp %98 : vector<8x8xf32>
    %cst_29 = arith.constant dense<0.000000e+00> : vector<8xf32>
    %100 = vector.multi_reduction <add>, %99, %cst_29 [1] : vector<8x8xf32> to vector<8xf32>
    %101 = vector.shape_cast %100 : vector<8xf32> to vector<8x1xf32>
    %102 = vector.broadcast %101 : vector<8x1xf32> to vector<8x8xf32>
    %103 = arith.divf %99, %102 : vector<8x8xf32>
    %cst_30 = arith.constant dense<0.000000e+00> : vector<8x8xf32>
    %104 = tpu.matmul %103, %91, %cst_30 {dimension_numbers = #tpu.dot_dimension_numbers<[1], [0], [0], [1], [0, 0, 1, 1], [], []>} : vector<8x8xf32>, vector<8x8xf32>, vector<8x8xf32> -> vector<8x8xf32>
    %105 = vector.extract_strided_slice %8 {offsets = [24, 0], sizes = [8, 32], strides = [1, 1]} : vector<32x32xf32> to vector<8x32xf32>
    %cst_31 = arith.constant dense<0.000000e+00> : vector<8x32xf32>
    %106 = tpu.matmul %104, %105, %cst_31 {dimension_numbers = #tpu.dot_dimension_numbers<[1], [0], [0], [1], [0, 0, 1, 1], [], []>} : vector<8x8xf32>, vector<8x32xf32>, vector<8x32xf32> -> vector<8x32xf32>
    %107 = arith.addf %88, %106 : vector<8x32xf32>
    %cst_32 = arith.constant 0.000000e+00 : f32
    %108 = vector.broadcast %cst_32 : f32 to vector<8x32xf32>
    %109 = vector.extract_strided_slice %24 {offsets = [8, 0], sizes = [8, 8], strides = [1, 1]} : vector<16x32xf32> to vector<8x8xf32>
    %110 = vector.extract_strided_slice %27 {offsets = [8, 0], sizes = [8, 8], strides = [1, 1]} : vector<16x32xf32> to vector<8x8xf32>
    %111 = vector.extract_strided_slice %30 {offsets = [8, 0], sizes = [8, 8], strides = [1, 1]} : vector<16x32xf32> to vector<8x8xf32>
    %cst_33 = arith.constant dense<0.000000e+00> : vector<8x8xf32>
    %112 = tpu.matmul %109, %110, %cst_33 {dimension_numbers = #tpu.dot_dimension_numbers<[1], [1], [0], [0], [0, 0, 1, 0], [], []>} : vector<8x8xf32>, vector<8x8xf32>, vector<8x8xf32> -> vector<8x8xf32>
    %cst_34 = arith.constant 0.353553385 : f32
    %113 = vector.broadcast %cst_34 : f32 to vector<8x8xf32>
    %114 = arith.mulf %112, %113 : vector<8x8xf32>
    %cst_35 = arith.constant dense<0xFF800000> : vector<8xf32>
    %115 = vector.multi_reduction <maximumf>, %114, %cst_35 [1] : vector<8x8xf32> to vector<8xf32>
    %116 = vector.shape_cast %115 : vector<8xf32> to vector<8x1xf32>
    %117 = vector.broadcast %116 : vector<8x1xf32> to vector<8x8xf32>
    %118 = arith.subf %114, %117 : vector<8x8xf32>
    %119 = math.exp %118 : vector<8x8xf32>
    %cst_36 = arith.constant dense<0.000000e+00> : vector<8xf32>
    %120 = vector.multi_reduction <add>, %119, %cst_36 [1] : vector<8x8xf32> to vector<8xf32>
    %121 = vector.shape_cast %120 : vector<8xf32> to vector<8x1xf32>
    %122 = vector.broadcast %121 : vector<8x1xf32> to vector<8x8xf32>
    %123 = arith.divf %119, %122 : vector<8x8xf32>
    %cst_37 = arith.constant dense<0.000000e+00> : vector<8x8xf32>
    %124 = tpu.matmul %123, %111, %cst_37 {dimension_numbers = #tpu.dot_dimension_numbers<[1], [0], [0], [1], [0, 0, 1, 1], [], []>} : vector<8x8xf32>, vector<8x8xf32>, vector<8x8xf32> -> vector<8x8xf32>
    %125 = vector.extract_strided_slice %8 {offsets = [0, 0], sizes = [8, 32], strides = [1, 1]} : vector<32x32xf32> to vector<8x32xf32>
    %cst_38 = arith.constant dense<0.000000e+00> : vector<8x32xf32>
    %126 = tpu.matmul %124, %125, %cst_38 {dimension_numbers = #tpu.dot_dimension_numbers<[1], [0], [0], [1], [0, 0, 1, 1], [], []>} : vector<8x8xf32>, vector<8x32xf32>, vector<8x32xf32> -> vector<8x32xf32>
    %127 = arith.addf %108, %126 : vector<8x32xf32>
    %128 = vector.extract_strided_slice %24 {offsets = [8, 8], sizes = [8, 8], strides = [1, 1]} : vector<16x32xf32> to vector<8x8xf32>
    %129 = vector.extract_strided_slice %27 {offsets = [8, 8], sizes = [8, 8], strides = [1, 1]} : vector<16x32xf32> to vector<8x8xf32>
    %130 = vector.extract_strided_slice %30 {offsets = [8, 8], sizes = [8, 8], strides = [1, 1]} : vector<16x32xf32> to vector<8x8xf32>
    %cst_39 = arith.constant dense<0.000000e+00> : vector<8x8xf32>
    %131 = tpu.matmul %128, %129, %cst_39 {dimension_numbers = #tpu.dot_dimension_numbers<[1], [1], [0], [0], [0, 0, 1, 0], [], []>} : vector<8x8xf32>, vector<8x8xf32>, vector<8x8xf32> -> vector<8x8xf32>
    %cst_40 = arith.constant 0.353553385 : f32
    %132 = vector.broadcast %cst_40 : f32 to vector<8x8xf32>
    %133 = arith.mulf %131, %132 : vector<8x8xf32>
    %cst_41 = arith.constant dense<0xFF800000> : vector<8xf32>
    %134 = vector.multi_reduction <maximumf>, %133, %cst_41 [1] : vector<8x8xf32> to vector<8xf32>
    %135 = vector.shape_cast %134 : vector<8xf32> to vector<8x1xf32>
    %136 = vector.broadcast %135 : vector<8x1xf32> to vector<8x8xf32>
    %137 = arith.subf %133, %136 : vector<8x8xf32>
    %138 = math.exp %137 : vector<8x8xf32>
    %cst_42 = arith.constant dense<0.000000e+00> : vector<8xf32>
    %139 = vector.multi_reduction <add>, %138, %cst_42 [1] : vector<8x8xf32> to vector<8xf32>
    %140 = vector.shape_cast %139 : vector<8xf32> to vector<8x1xf32>
    %141 = vector.broadcast %140 : vector<8x1xf32> to vector<8x8xf32>
    %142 = arith.divf %138, %141 : vector<8x8xf32>
    %cst_43 = arith.constant dense<0.000000e+00> : vector<8x8xf32>
    %143 = tpu.matmul %142, %130, %cst_43 {dimension_numbers = #tpu.dot_dimension_numbers<[1], [0], [0], [1], [0, 0, 1, 1], [], []>} : vector<8x8xf32>, vector<8x8xf32>, vector<8x8xf32> -> vector<8x8xf32>
    %144 = vector.extract_strided_slice %8 {offsets = [8, 0], sizes = [8, 32], strides = [1, 1]} : vector<32x32xf32> to vector<8x32xf32>
    %cst_44 = arith.constant dense<0.000000e+00> : vector<8x32xf32>
    %145 = tpu.matmul %143, %144, %cst_44 {dimension_numbers = #tpu.dot_dimension_numbers<[1], [0], [0], [1], [0, 0, 1, 1], [], []>} : vector<8x8xf32>, vector<8x32xf32>, vector<8x32xf32> -> vector<8x32xf32>
    %146 = arith.addf %127, %145 : vector<8x32xf32>
    %147 = vector.extract_strided_slice %24 {offsets = [8, 16], sizes = [8, 8], strides = [1, 1]} : vector<16x32xf32> to vector<8x8xf32>
    %148 = vector.extract_strided_slice %27 {offsets = [8, 16], sizes = [8, 8], strides = [1, 1]} : vector<16x32xf32> to vector<8x8xf32>
    %149 = vector.extract_strided_slice %30 {offsets = [8, 16], sizes = [8, 8], strides = [1, 1]} : vector<16x32xf32> to vector<8x8xf32>
    %cst_45 = arith.constant dense<0.000000e+00> : vector<8x8xf32>
    %150 = tpu.matmul %147, %148, %cst_45 {dimension_numbers = #tpu.dot_dimension_numbers<[1], [1], [0], [0], [0, 0, 1, 0], [], []>} : vector<8x8xf32>, vector<8x8xf32>, vector<8x8xf32> -> vector<8x8xf32>
    %cst_46 = arith.constant 0.353553385 : f32
    %151 = vector.broadcast %cst_46 : f32 to vector<8x8xf32>
    %152 = arith.mulf %150, %151 : vector<8x8xf32>
    %cst_47 = arith.constant dense<0xFF800000> : vector<8xf32>
    %153 = vector.multi_reduction <maximumf>, %152, %cst_47 [1] : vector<8x8xf32> to vector<8xf32>
    %154 = vector.shape_cast %153 : vector<8xf32> to vector<8x1xf32>
    %155 = vector.broadcast %154 : vector<8x1xf32> to vector<8x8xf32>
    %156 = arith.subf %152, %155 : vector<8x8xf32>
    %157 = math.exp %156 : vector<8x8xf32>
    %cst_48 = arith.constant dense<0.000000e+00> : vector<8xf32>
    %158 = vector.multi_reduction <add>, %157, %cst_48 [1] : vector<8x8xf32> to vector<8xf32>
    %159 = vector.shape_cast %158 : vector<8xf32> to vector<8x1xf32>
    %160 = vector.broadcast %159 : vector<8x1xf32> to vector<8x8xf32>
    %161 = arith.divf %157, %160 : vector<8x8xf32>
    %cst_49 = arith.constant dense<0.000000e+00> : vector<8x8xf32>
    %162 = tpu.matmul %161, %149, %cst_49 {dimension_numbers = #tpu.dot_dimension_numbers<[1], [0], [0], [1], [0, 0, 1, 1], [], []>} : vector<8x8xf32>, vector<8x8xf32>, vector<8x8xf32> -> vector<8x8xf32>
    %163 = vector.extract_strided_slice %8 {offsets = [16, 0], sizes = [8, 32], strides = [1, 1]} : vector<32x32xf32> to vector<8x32xf32>
    %cst_50 = arith.constant dense<0.000000e+00> : vector<8x32xf32>
    %164 = tpu.matmul %162, %163, %cst_50 {dimension_numbers = #tpu.dot_dimension_numbers<[1], [0], [0], [1], [0, 0, 1, 1], [], []>} : vector<8x8xf32>, vector<8x32xf32>, vector<8x32xf32> -> vector<8x32xf32>
    %165 = arith.addf %146, %164 : vector<8x32xf32>
    %166 = vector.extract_strided_slice %24 {offsets = [8, 24], sizes = [8, 8], strides = [1, 1]} : vector<16x32xf32> to vector<8x8xf32>
    %167 = vector.extract_strided_slice %27 {offsets = [8, 24], sizes = [8, 8], strides = [1, 1]} : vector<16x32xf32> to vector<8x8xf32>
    %168 = vector.extract_strided_slice %30 {offsets = [8, 24], sizes = [8, 8], strides = [1, 1]} : vector<16x32xf32> to vector<8x8xf32>
    %cst_51 = arith.constant dense<0.000000e+00> : vector<8x8xf32>
    %169 = tpu.matmul %166, %167, %cst_51 {dimension_numbers = #tpu.dot_dimension_numbers<[1], [1], [0], [0], [0, 0, 1, 0], [], []>} : vector<8x8xf32>, vector<8x8xf32>, vector<8x8xf32> -> vector<8x8xf32>
    %cst_52 = arith.constant 0.353553385 : f32
    %170 = vector.broadcast %cst_52 : f32 to vector<8x8xf32>
    %171 = arith.mulf %169, %170 : vector<8x8xf32>
    %cst_53 = arith.constant dense<0xFF800000> : vector<8xf32>
    %172 = vector.multi_reduction <maximumf>, %171, %cst_53 [1] : vector<8x8xf32> to vector<8xf32>
    %173 = vector.shape_cast %172 : vector<8xf32> to vector<8x1xf32>
    %174 = vector.broadcast %173 : vector<8x1xf32> to vector<8x8xf32>
    %175 = arith.subf %171, %174 : vector<8x8xf32>
    %176 = math.exp %175 : vector<8x8xf32>
    %cst_54 = arith.constant dense<0.000000e+00> : vector<8xf32>
    %177 = vector.multi_reduction <add>, %176, %cst_54 [1] : vector<8x8xf32> to vector<8xf32>
    %178 = vector.shape_cast %177 : vector<8xf32> to vector<8x1xf32>
    %179 = vector.broadcast %178 : vector<8x1xf32> to vector<8x8xf32>
    %180 = arith.divf %176, %179 : vector<8x8xf32>
    %cst_55 = arith.constant dense<0.000000e+00> : vector<8x8xf32>
    %181 = tpu.matmul %180, %168, %cst_55 {dimension_numbers = #tpu.dot_dimension_numbers<[1], [0], [0], [1], [0, 0, 1, 1], [], []>} : vector<8x8xf32>, vector<8x8xf32>, vector<8x8xf32> -> vector<8x8xf32>
    %182 = vector.extract_strided_slice %8 {offsets = [24, 0], sizes = [8, 32], strides = [1, 1]} : vector<32x32xf32> to vector<8x32xf32>
    %cst_56 = arith.constant dense<0.000000e+00> : vector<8x32xf32>
    %183 = tpu.matmul %181, %182, %cst_56 {dimension_numbers = #tpu.dot_dimension_numbers<[1], [0], [0], [1], [0, 0, 1, 1], [], []>} : vector<8x8xf32>, vector<8x32xf32>, vector<8x32xf32> -> vector<8x32xf32>
    %184 = arith.addf %165, %183 : vector<8x32xf32>
    %185 = tpu.concatenate %107, %184 in 0 : vector<8x32xf32>, vector<8x32xf32> -> vector<16x32xf32>
    %186 = vector.broadcast %15 : vector<1x32xf32> to vector<16x32xf32>
    %187 = arith.addf %185, %186 : vector<16x32xf32>
    %188 = arith.addf %187, %1 : vector<16x32xf32>
    %cst_57 = arith.constant dense<0.000000e+00> : vector<16xf32>
    %189 = vector.multi_reduction <add>, %188, %cst_57 [1] : vector<16x32xf32> to vector<16xf32>
    %190 = vector.shape_cast %189 : vector<16xf32> to vector<16x1xf32>
    %cst_58 = arith.constant 3.200000e+01 : f32
    %191 = vector.broadcast %cst_58 : f32 to vector<16x1xf32>
    %192 = arith.divf %190, %191 : vector<16x1xf32>
    %193 = vector.broadcast %192 : vector<16x1xf32> to vector<16x32xf32>
    %194 = arith.subf %188, %193 : vector<16x32xf32>
    %195 = arith.mulf %194, %194 : vector<16x32xf32>
    %cst_59 = arith.constant dense<0.000000e+00> : vector<16xf32>
    %196 = vector.multi_reduction <add>, %195, %cst_59 [1] : vector<16x32xf32> to vector<16xf32>
    %197 = vector.shape_cast %196 : vector<16xf32> to vector<16x1xf32>
    %cst_60 = arith.constant 3.200000e+01 : f32
    %198 = vector.broadcast %cst_60 : f32 to vector<16x1xf32>
    %199 = arith.divf %197, %198 : vector<16x1xf32>
    %200 = vector.broadcast %192 : vector<16x1xf32> to vector<16x32xf32>
    %201 = arith.subf %188, %200 : vector<16x32xf32>
    %cst_61 = arith.constant 9.99999974E-6 : f32
    %202 = vector.broadcast %cst_61 : f32 to vector<16x1xf32>
    %203 = arith.addf %199, %202 : vector<16x1xf32>
    %204 = math.rsqrt %203 : vector<16x1xf32>
    %205 = vector.broadcast %204 : vector<16x1xf32> to vector<16x32xf32>
    %206 = arith.mulf %201, %205 : vector<16x32xf32>
    %207 = vector.broadcast %16 : vector<1x32xf32> to vector<16x32xf32>
    %208 = arith.mulf %206, %207 : vector<16x32xf32>
    %209 = vector.broadcast %17 : vector<1x32xf32> to vector<16x32xf32>
    %210 = arith.addf %208, %209 : vector<16x32xf32>
    %cst_62 = arith.constant dense<0.000000e+00> : vector<16x32xf32>
    %211 = tpu.matmul %210, %9, %cst_62 {dimension_numbers = #tpu.dot_dimension_numbers<[1], [0], [0], [1], [0, 0, 1, 1], [], []>} : vector<16x32xf32>, vector<32x32xf32>, vector<16x32xf32> -> vector<16x32xf32>
    %212 = vector.broadcast %18 : vector<1x32xf32> to vector<16x32xf32>
    %213 = arith.addf %211, %212 : vector<16x32xf32>
    %cst_63 = arith.constant 5.000000e-01 : f32
    %214 = vector.broadcast %cst_63 : f32 to vector<16x32xf32>
    %215 = arith.mulf %214, %213 : vector<16x32xf32>
    %cst_64 = arith.constant 0.707106769 : f32
    %216 = vector.broadcast %cst_64 : f32 to vector<16x32xf32>
    %217 = arith.mulf %213, %216 : vector<16x32xf32>
    %218 = math.erf %217 : vector<16x32xf32>
    %cst_65 = arith.constant 1.000000e+00 : f32
    %219 = vector.broadcast %cst_65 : f32 to vector<16x32xf32>
    %220 = arith.addf %219, %218 : vector<16x32xf32>
    %221 = arith.mulf %215, %220 : vector<16x32xf32>
    %cst_66 = arith.constant dense<0.000000e+00> : vector<16x32xf32>
    %222 = tpu.matmul %221, %10, %cst_66 {dimension_numbers = #tpu.dot_dimension_numbers<[1], [0], [0], [1], [0, 0, 1, 1], [], []>} : vector<16x32xf32>, vector<32x32xf32>, vector<16x32xf32> -> vector<16x32xf32>
    %223 = vector.broadcast %19 : vector<1x32xf32> to vector<16x32xf32>
    %224 = arith.addf %222, %223 : vector<16x32xf32>
    %225 = arith.addf %224, %210 : vector<16x32xf32>
    %cst_67 = arith.constant dense<0.000000e+00> : vector<16xf32>
    %226 = vector.multi_reduction <add>, %225, %cst_67 [1] : vector<16x32xf32> to vector<16xf32>
    %227 = vector.shape_cast %226 : vector<16xf32> to vector<16x1xf32>
    %cst_68 = arith.constant 3.200000e+01 : f32
    %228 = vector.broadcast %cst_68 : f32 to vector<16x1xf32>
    %229 = arith.divf %227, %228 : vector<16x1xf32>
    %230 = vector.broadcast %229 : vector<16x1xf32> to vector<16x32xf32>
    %231 = arith.subf %225, %230 : vector<16x32xf32>
    %232 = arith.mulf %231, %231 : vector<16x32xf32>
    %cst_69 = arith.constant dense<0.000000e+00> : vector<16xf32>
    %233 = vector.multi_reduction <add>, %232, %cst_69 [1] : vector<16x32xf32> to vector<16xf32>
    %234 = vector.shape_cast %233 : vector<16xf32> to vector<16x1xf32>
    %cst_70 = arith.constant 3.200000e+01 : f32
    %235 = vector.broadcast %cst_70 : f32 to vector<16x1xf32>
    %236 = arith.divf %234, %235 : vector<16x1xf32>
    %237 = vector.broadcast %229 : vector<16x1xf32> to vector<16x32xf32>
    %238 = arith.subf %225, %237 : vector<16x32xf32>
    %cst_71 = arith.constant 9.99999974E-6 : f32
    %239 = vector.broadcast %cst_71 : f32 to vector<16x1xf32>
    %240 = arith.addf %236, %239 : vector<16x1xf32>
    %241 = math.rsqrt %240 : vector<16x1xf32>
    %242 = vector.broadcast %241 : vector<16x1xf32> to vector<16x32xf32>
    %243 = arith.mulf %238, %242 : vector<16x32xf32>
    %244 = vector.broadcast %20 : vector<1x32xf32> to vector<16x32xf32>
    %245 = arith.mulf %243, %244 : vector<16x32xf32>
    %246 = vector.broadcast %21 : vector<1x32xf32> to vector<16x32xf32>
    %247 = arith.addf %245, %246 : vector<16x32xf32>
    %c0_72 = arith.constant 0 : index
    %c0_73 = arith.constant 0 : index
    %248 = vector.load %arg4[%c0_72, %c0_73] : memref<16x32xf32, #tpu.memory_space<vmem>>, vector<16x32xf32>
    tpu.vector_store %arg4[%c0_72, %c0_73], %247 {strides = array<i32>} : memref<16x32xf32, #tpu.memory_space<vmem>>, vector<16x32xf32>,
    return
  }
  func.func @transform_0(%arg0: i32) -> (i32, i32) {
    %c0_i32 = arith.constant 0 : i32
    %c0_i32_0 = arith.constant 0 : i32
    %c0_i32_1 = arith.constant 0 : i32
    return %c0_i32, %c0_i32_0 : i32, i32
  }
  func.func @transform_1(%arg0: i32) -> (i32, i32) {
    %c0_i32 = arith.constant 0 : i32
    %c0_i32_0 = arith.constant 0 : i32
    %c0_i32_1 = arith.constant 0 : i32
    return %c0_i32, %c0_i32_0 : i32, i32
  }
  func.func @transform_2(%arg0: i32) -> (i32, i32) {
    %c0_i32 = arith.constant 0 : i32
    %c0_i32_0 = arith.constant 0 : i32
    %c0_i32_1 = arith.constant 0 : i32
    return %c0_i32, %c0_i32_0 : i32, i32
  }
  func.func @transform_3(%arg0: i32) -> (i32, i32) {
    %c0_i32 = arith.constant 0 : i32
    %c0_i32_0 = arith.constant 0 : i32
    %c0_i32_1 = arith.constant 0 : i32
    return %c0_i32, %c0_i32_0 : i32, i32
  }
}

</mosaic_0001>

<llo_original>
// kernel: tpu_custom_call.1
$region0: #{tpu_custom_call.1}
  #allocation0 [shape = 'u32[]', space=smem, size = 0x4, offset = 0x4, fixed_abs, tag = 'smem constant byte address 0x4 - core index']
  #allocation1 [shape = 'u32[72,128]{1,0:T(1,128)}', space=vmem, size = 0x9000, scoped, tag = 'internal scratch']
  %s0 = inlined_call_operand.vmem [shape: f32[48,32], index: 0, kind: input, shape index: {}]
  %s1 = inlined_call_operand.vmem [shape: f32[192,32], index: 1, kind: input, shape index: {}]
  %s2 = inlined_call_operand.vmem [shape: f32[16,128], index: 2, kind: input, shape index: {}]
  %s3 = inlined_call_operand.hbm [shape: f32[16,32], index: 3, kind: output, shape index: {}]
  %s4 = sld [smem:[#allocation0]]
  $region22: #{tpu_custom_call.1} parent=0
    _
  %s6 = ssub.s32 1, %s4
  %s7 = scalar_select 0, %s6, %s4
  $region1: #{tpu_custom_call.1} parent=0
    #allocation2 [shape = 'u8[8192]{0}', space=vmem, size = 0x2000, scoped, tag = 'output window, operand 0, single buffered']
    #allocation3 [shape = 's32[1]{0}', space=sflag, size = 0x4, scoped, tag = 'scoped memory for tpu_custom_call.1']
    %8 = vsyncpa [#allocation3], 0
    // Predicated region
    $region2: #{tpu_custom_call.1} parent=1 // pred_check
      _
    $region3: #{tpu_custom_call.1} parent=1 // pred_check_branch
      %10 = sbr.rel (0) target = $region5
    $region4: #{tpu_custom_call.1} parent=1 // pred_region
      _
    $region5: #{tpu_custom_call.1} parent=1 // pred_fallthru
      _
    // Predicated region
    $region6: #{tpu_custom_call.1} parent=1 // pred_check
      _
    $region7: #{tpu_custom_call.1} parent=1 // pred_check_branch
      %12 = sbr.rel (0) target = $region9
    $region8: #{tpu_custom_call.1} parent=1 // pred_region
      _
    $region9: #{tpu_custom_call.1} parent=1 // pred_fallthru
      _
    // Predicated region
    $region10: #{tpu_custom_call.1} parent=1 // pred_check
      _
    $region11: #{tpu_custom_call.1} parent=1 // pred_check_branch
      %14 = sbr.rel (0) target = $region13
    $region12: #{tpu_custom_call.1} parent=1 // pred_region
      _
    $region13: #{tpu_custom_call.1} parent=1 // pred_fallthru
      _
    %v15 = vld [vmem:[%s0] sm:$0xff]
    %v16 = vld [vmem:[%s0 + $0x8] sm:$0xff]
    %v17 = vld [vmem:[%s0 + $0x10] sm:$0xff]
    %v18 = vld [vmem:[%s0 + $0x18] sm:$0xff]
    %v19 = vld [vmem:[%s0 + $0x20] sm:$0xff]
    %v20 = vld [vmem:[%s0 + $0x28] sm:$0xff]
    %v21 = vld [vmem:[%s1] sm:$0xff]
    %v22 = vld [vmem:[%s1 + $0x8] sm:$0xff]
    %v23 = vld [vmem:[%s1 + $0x10] sm:$0xff]
    %v24 = vld [vmem:[%s1 + $0x18] sm:$0xff]
    %v25 = vld [vmem:[%s1 + $0x20] sm:$0xff]
    %v26 = vld [vmem:[%s1 + $0x28] sm:$0xff]
    %v27 = vld [vmem:[%s1 + $0x30] sm:$0xff]
    %v28 = vld [vmem:[%s1 + $0x38] sm:$0xff]
    %v29 = vld [vmem:[%s1 + $0x40] sm:$0xff]
    %v30 = vld [vmem:[%s1 + $0x48] sm:$0xff]
    %v31 = vld [vmem:[%s1 + $0x50] sm:$0xff]
    %v32 = vld [vmem:[%s1 + $0x58] sm:$0xff]
    %v33 = vld [vmem:[%s1 + $0x60] sm:$0xff]
    %v34 = vld [vmem:[%s1 + $0x68] sm:$0xff]
    %v35 = vld [vmem:[%s1 + $0x70] sm:$0xff]
    %v36 = vld [vmem:[%s1 + $0x78] sm:$0xff]
    %v37 = vld [vmem:[%s1 + $0x80] sm:$0xff]
    %v38 = vld [vmem:[%s1 + $0x88] sm:$0xff]
    %v39 = vld [vmem:[%s1 + $0x90] sm:$0xff]
    %v40 = vld [vmem:[%s1 + $0x98] sm:$0xff]
    %v41 = vld [vmem:[%s1 + $0xa0] sm:$0xff]
    %v42 = vld [vmem:[%s1 + $0xa8] sm:$0xff]
    %v43 = vld [vmem:[%s1 + $0xb0] sm:$0xff]
    %v44 = vld [vmem:[%s1 + $0xb8] sm:$0xff]
    %v45 = vld [vmem:[%s2] sm:$0xff]
    %v46 = vld [vmem:[%s2 + $0x8] sm:$0xff]
    %v47 = vperm.slane %v45, 0
    %vm48 = vcmask 261120
    %v50 = vsel %vm48, %v15, 0
    %v53 = vsel %vm48, %v16, 0
    %55 = vmatpush.msra.mxu0 0.0
    %56 = vmatpush.msra.mxu0 0.0
    %57 = vmatpush.msra.mxu0 0.0
    %58 = vmatpush.msra.mxu0 0.0
    %59 = vmatpush.msra.mxu0 0.0
    %60 = vmatpush.msra.mxu0 0.0
    %61 = vmatpush.msra.mxu0 0.0
    %62 = vmatpush.msra.mxu0 0.0
    %63 = vmatpush.msra.mxu0 0.0
    %64 = vmatpush.msra.mxu0 0.0
    %65 = vmatpush.msra.mxu0 0.0
    %66 = vmatpush.msra.mxu0 0.0
    %67 = vmatpush.msra.mxu0 %v24
    %68 = vmatpush.msra.mxu0 %v23
    %69 = vmatpush.msra.mxu0 %v22
    %70 = vmatpush.msra.mxu0 %v21
    %71 = vmatmul.f32.gmra.mxu0 %v50
    %v72 = vpop.f32.mrf.mxu0
    %v73 = vadd.f32 %v47, %v72
    %74 = vmatmul.f32.gmra.mxu0 %v53
    %v75 = vpop.f32.mrf.mxu0
    %v76 = vadd.f32 %v47, %v75
    %77 = vdwg.mxu0
    %v78 = vperm.slane %v45, 1
    %v80 = vsel %vm48, %v17, 0
    %v83 = vsel %vm48, %v18, 0
    %85 = vmatpush.msra.mxu0 0.0
    %86 = vmatpush.msra.mxu0 0.0
    %87 = vmatpush.msra.mxu0 0.0
    %88 = vmatpush.msra.mxu0 0.0
    %89 = vmatpush.msra.mxu0 0.0
    %90 = vmatpush.msra.mxu0 0.0
    %91 = vmatpush.msra.mxu0 0.0
    %92 = vmatpush.msra.mxu0 0.0
    %93 = vmatpush.msra.mxu0 0.0
    %94 = vmatpush.msra.mxu0 0.0
    %95 = vmatpush.msra.mxu0 0.0
    %96 = vmatpush.msra.mxu0 0.0
    %97 = vmatpush.msra.mxu0 %v28
    %98 = vmatpush.msra.mxu0 %v27
    %99 = vmatpush.msra.mxu0 %v26
    %100 = vmatpush.msra.mxu0 %v25
    %101 = vmatmul.f32.gmra.mxu0 %v80
    %v102 = vpop.f32.mrf.mxu0
    %v103 = vadd.f32 %v78, %v102
    %104 = vmatmul.f32.gmra.mxu0 %v83
    %v105 = vpop.f32.mrf.mxu0
    %v106 = vadd.f32 %v78, %v105
    %107 = vdwg.mxu0
    %v108 = vperm.slane %v45, 2
    %v110 = vsel %vm48, %v19, 0
    %v113 = vsel %vm48, %v20, 0
    %115 = vmatpush.msra.mxu0 0.0
    %116 = vmatpush.msra.mxu0 0.0
    %117 = vmatpush.msra.mxu0 0.0
    %118 = vmatpush.msra.mxu0 0.0
    %119 = vmatpush.msra.mxu0 0.0
    %120 = vmatpush.msra.mxu0 0.0
    %121 = vmatpush.msra.mxu0 0.0
    %122 = vmatpush.msra.mxu0 0.0
    %123 = vmatpush.msra.mxu0 0.0
    %124 = vmatpush.msra.mxu0 0.0
    %125 = vmatpush.msra.mxu0 0.0
    %126 = vmatpush.msra.mxu0 0.0
    %127 = vmatpush.msra.mxu0 %v32
    %128 = vmatpush.msra.mxu0 %v31
    %129 = vmatpush.msra.mxu0 %v30
    %130 = vmatpush.msra.mxu0 %v29
    %131 = vmatmul.f32.gmra.mxu0 %v110
    %v132 = vpop.f32.mrf.mxu0
    %v133 = vadd.f32 %v108, %v132
    %134 = vmatmul.f32.gmra.mxu0 %v113
    %v135 = vpop.f32.mrf.mxu0
    %v136 = vadd.f32 %v108, %v135
    %137 = vdwg.mxu0
    %vm138 = vcmask 64512
    %v140 = vsel %vm138, %v73, 0
    %v143 = vsel %vm138, %v103, 0
    %145 = vmatpush.xpose.msra.mxu0 0.0
    %146 = vmatpush.xpose.msra.mxu0 0.0
    %147 = vmatpush.xpose.msra.mxu0 0.0
    %148 = vmatpush.xpose.msra.mxu0 0.0
    %149 = vmatpush.xpose.msra.mxu0 0.0
    %150 = vmatpush.xpose.msra.mxu0 0.0
    %151 = vmatpush.xpose.msra.mxu0 0.0
    %152 = vmatpush.xpose.msra.mxu0 0.0
    %153 = vmatpush.xpose.msra.mxu0 0.0
    %154 = vmatpush.xpose.msra.mxu0 0.0
    %155 = vmatpush.xpose.msra.mxu0 0.0
    %156 = vmatpush.xpose.msra.mxu0 0.0
    %157 = vmatpush.xpose.msra.mxu0 0.0
    %158 = vmatpush.xpose.msra.mxu0 0.0
    %159 = vmatpush.xpose.msra.mxu0 0.0
    %160 = vmatpush.xpose.msra.mxu0 %v143
    %161 = vmatmul.f32.gmra.mxu0 %v140
    %v162 = vpop.f32.mrf.mxu0
    %v163 = vadd.f32 0.0, %v162
    %164 = vdwg.mxu0
    %v165 = vmul.f32 %v163, 0.35355338
    %v166 = vsel %vm138, %v165, -inf
    %167 = vmax.xlane.f32.xlu0 %v166
    %v168 = vpop.xlane.xlu0 %167
    %v169 = vsub.f32 %v165, %v168
    %v170 = vmul.f32 %v169, 1.442695
    %v171 = vpow.pop %v170
    %v172 = vsel %vm138, %v171, 0.0
    %173 = vadd.xlane.f32.xlu0 %v172
    %v174 = vpop.xlane.xlu0 %173
    %v175 = vrcp.pop %v174
    %v176 = vmul.f32 %v174, %v175
    %v177 = vsub.f32 1.0, %v176
    %v178 = vmul.f32 %v175, %v177
    %v179 = vadd.f32 %v175, %v178
    %vm180 = vweird.f32 %v174
    %vm181 = vweird.f32 %v175
    %vm182 = vmor %vm180, %vm181
    %v183 = vsel %vm182, %v175, %v179
    %v184 = vand.u32 2147483647, %v174
    %vm185 = vcmp.eq.f32.partialorder %v184, 8.507059e+37
    %v186 = vand.u32 %v174, 2147483648
    %v187 = vor.u32 1.1754944e-38, %v186
    %v188 = vsel %vm185, %v187, %v183
    %v189 = vmul.f32 %v171, %v188
    %v191 = vsel %vm138, %v189, 0
    %193 = vmatpush.msra.mxu0 0.0
    %194 = vmatpush.msra.mxu0 0.0
    %195 = vmatpush.msra.mxu0 0.0
    %196 = vmatpush.msra.mxu0 0.0
    %197 = vmatpush.msra.mxu0 0.0
    %198 = vmatpush.msra.mxu0 0.0
    %199 = vmatpush.msra.mxu0 0.0
    %200 = vmatpush.msra.mxu0 0.0
    %201 = vmatpush.msra.mxu0 0.0
    %202 = vmatpush.msra.mxu0 0.0
    %203 = vmatpush.msra.mxu0 0.0
    %204 = vmatpush.msra.mxu0 0.0
    %205 = vmatpush.msra.mxu0 0.0
    %206 = vmatpush.msra.mxu0 0.0
    %207 = vmatpush.msra.mxu0 0.0
    %208 = vmatpush.msra.mxu0 %v133
    %209 = vmatmul.f32.gmra.mxu0 %v191
    %v210 = vpop.f32.mrf.mxu0
    %v211 = vadd.f32 0.0, %v210
    %212 = vdwg.mxu0
    %213 = vrot.lane.b32.xlu0 %v73, 120
    %v214 = vpop.permute.xlu0 %213
    %215 = vrot.lane.b32.xlu0 %v103, 120
    %v216 = vpop.permute.xlu0 %215
    %v217 = vsel %vm138, %v214, 0
    %v219 = vsel %vm138, %v216, 0
    %221 = vmatpush.xpose.msra.mxu0 0.0
    %222 = vmatpush.xpose.msra.mxu0 0.0
    %223 = vmatpush.xpose.msra.mxu0 0.0
    %224 = vmatpush.xpose.msra.mxu0 0.0
    %225 = vmatpush.xpose.msra.mxu0 0.0
    %226 = vmatpush.xpose.msra.mxu0 0.0
    %227 = vmatpush.xpose.msra.mxu0 0.0
    %228 = vmatpush.xpose.msra.mxu0 0.0
    %229 = vmatpush.xpose.msra.mxu0 0.0
    %230 = vmatpush.xpose.msra.mxu0 0.0
    %231 = vmatpush.xpose.msra.mxu0 0.0
    %232 = vmatpush.xpose.msra.mxu0 0.0
    %233 = vmatpush.xpose.msra.mxu0 0.0
    %234 = vmatpush.xpose.msra.mxu0 0.0
    %235 = vmatpush.xpose.msra.mxu0 0.0
    %236 = vmatpush.xpose.msra.mxu0 %v219
    %237 = vmatmul.f32.gmra.mxu0 %v217
    %v238 = vpop.f32.mrf.mxu0
    %v239 = vadd.f32 0.0, %v238
    %240 = vdwg.mxu0
    %v241 = vmul.f32 %v239, 0.35355338
    %v242 = vsel %vm138, %v241, -inf
    %243 = vmax.xlane.f32.xlu0 %v242
    %v244 = vpop.xlane.xlu0 %243
    %v245 = vsub.f32 %v241, %v244
    %v246 = vmul.f32 %v245, 1.442695
    %v247 = vpow.pop %v246
    %v248 = vsel %vm138, %v247, 0.0
    %249 = vadd.xlane.f32.xlu0 %v248
    %v250 = vpop.xlane.xlu0 %249
    %v251 = vrcp.pop %v250
    %v252 = vmul.f32 %v250, %v251
    %v253 = vsub.f32 1.0, %v252
    %v254 = vmul.f32 %v251, %v253
    %v255 = vadd.f32 %v251, %v254
    %vm256 = vweird.f32 %v250
    %vm257 = vweird.f32 %v251
    %vm258 = vmor %vm256, %vm257
    %v259 = vsel %vm258, %v251, %v255
    %v260 = vand.u32 2147483647, %v250
    %vm261 = vcmp.eq.f32.partialorder %v260, 8.507059e+37
    %v262 = vand.u32 %v250, 2147483648
    %v263 = vor.u32 1.1754944e-38, %v262
    %v264 = vsel %vm261, %v263, %v259
    %v265 = vmul.f32 %v247, %v264
    %267 = vrot.lane.b32.xlu0 %v133, 120
    %v268 = vpop.permute.xlu0 %267
    %v271 = vsel %vm138, %v265, 0
    %273 = vmatpush.msra.mxu0 0.0
    %274 = vmatpush.msra.mxu0 0.0
    %275 = vmatpush.msra.mxu0 0.0
    %276 = vmatpush.msra.mxu0 0.0
    %277 = vmatpush.msra.mxu0 0.0
    %278 = vmatpush.msra.mxu0 0.0
    %279 = vmatpush.msra.mxu0 0.0
    %280 = vmatpush.msra.mxu0 0.0
    %281 = vmatpush.msra.mxu0 0.0
    %282 = vmatpush.msra.mxu0 0.0
    %283 = vmatpush.msra.mxu0 0.0
    %284 = vmatpush.msra.mxu0 0.0
    %285 = vmatpush.msra.mxu0 0.0
    %286 = vmatpush.msra.mxu0 0.0
    %287 = vmatpush.msra.mxu0 0.0
    %288 = vmatpush.msra.mxu0 %v268
    %289 = vmatmul.f32.gmra.mxu0 %v271
    %v290 = vpop.f32.mrf.mxu0
    %v291 = vadd.f32 0.0, %v290
    %292 = vdwg.mxu0
    %v294 = vsel %vm138, %v291, 0
    %296 = vmatpush.msra.mxu0 0.0
    %297 = vmatpush.msra.mxu0 0.0
    %298 = vmatpush.msra.mxu0 0.0
    %299 = vmatpush.msra.mxu0 0.0
    %300 = vmatpush.msra.mxu0 0.0
    %301 = vmatpush.msra.mxu0 0.0
    %302 = vmatpush.msra.mxu0 0.0
    %303 = vmatpush.msra.mxu0 0.0
    %304 = vmatpush.msra.mxu0 0.0
    %305 = vmatpush.msra.mxu0 0.0
    %306 = vmatpush.msra.mxu0 0.0
    %307 = vmatpush.msra.mxu0 0.0
    %308 = vmatpush.msra.mxu0 0.0
    %309 = vmatpush.msra.mxu0 0.0
    %310 = vmatpush.msra.mxu0 0.0
    %311 = vmatpush.msra.mxu0 %v34
    %312 = vmatmul.f32.gmra.mxu0 %v294
    %v313 = vpop.f32.mrf.mxu0
    %v314 = vadd.f32 0.0, %v313
    %315 = vdwg.mxu0
    %v317 = vsel %vm138, %v211, 0
    %319 = vmatpush.msra.mxu0 0.0
    %320 = vmatpush.msra.mxu0 0.0
    %321 = vmatpush.msra.mxu0 0.0
    %322 = vmatpush.msra.mxu0 0.0
    %323 = vmatpush.msra.mxu0 0.0
    %324 = vmatpush.msra.mxu0 0.0
    %325 = vmatpush.msra.mxu0 0.0
    %326 = vmatpush.msra.mxu0 0.0
    %327 = vmatpush.msra.mxu0 0.0
    %328 = vmatpush.msra.mxu0 0.0
    %329 = vmatpush.msra.mxu0 0.0
    %330 = vmatpush.msra.mxu0 0.0
    %331 = vmatpush.msra.mxu0 0.0
    %332 = vmatpush.msra.mxu0 0.0
    %333 = vmatpush.msra.mxu0 0.0
    %334 = vmatpush.msra.mxu0 %v33
    %335 = vmatmul.f32.gmra.mxu0 %v317
    %v336 = vpop.f32.mrf.mxu0
    %v337 = vadd.f32 %v314, %v336
    %338 = vdwg.mxu0
    %339 = vrot.lane.b32.xlu0 %v73, 112
    %v340 = vpop.permute.xlu0 %339
    %341 = vrot.lane.b32.xlu0 %v103, 112
    %v342 = vpop.permute.xlu0 %341
    %v343 = vsel %vm138, %v340, 0
    %v345 = vsel %vm138, %v342, 0
    %347 = vmatpush.xpose.msra.mxu0 0.0
    %348 = vmatpush.xpose.msra.mxu0 0.0
    %349 = vmatpush.xpose.msra.mxu0 0.0
    %350 = vmatpush.xpose.msra.mxu0 0.0
    %351 = vmatpush.xpose.msra.mxu0 0.0
    %352 = vmatpush.xpose.msra.mxu0 0.0
    %353 = vmatpush.xpose.msra.mxu0 0.0
    %354 = vmatpush.xpose.msra.mxu0 0.0
    %355 = vmatpush.xpose.msra.mxu0 0.0
    %356 = vmatpush.xpose.msra.mxu0 0.0
    %357 = vmatpush.xpose.msra.mxu0 0.0
    %358 = vmatpush.xpose.msra.mxu0 0.0
    %359 = vmatpush.xpose.msra.mxu0 0.0
    %360 = vmatpush.xpose.msra.mxu0 0.0
    %361 = vmatpush.xpose.msra.mxu0 0.0
    %362 = vmatpush.xpose.msra.mxu0 %v345
    %363 = vmatmul.f32.gmra.mxu0 %v343
    %v364 = vpop.f32.mrf.mxu0
    %v365 = vadd.f32 0.0, %v364
    %366 = vdwg.mxu0
    %v367 = vmul.f32 %v365, 0.35355338
    %v368 = vsel %vm138, %v367, -inf
    %369 = vmax.xlane.f32.xlu0 %v368
    %v370 = vpop.xlane.xlu0 %369
    %v371 = vsub.f32 %v367, %v370
    %v372 = vmul.f32 %v371, 1.442695
    %v373 = vpow.pop %v372
    %v374 = vsel %vm138, %v373, 0.0
    %375 = vadd.xlane.f32.xlu0 %v374
    %v376 = vpop.xlane.xlu0 %375
    %v377 = vrcp.pop %v376
    %v378 = vmul.f32 %v376, %v377
    %v379 = vsub.f32 1.0, %v378
    %v380 = vmul.f32 %v377, %v379
    %v381 = vadd.f32 %v377, %v380
    %vm382 = vweird.f32 %v376
    %vm383 = vweird.f32 %v377
    %vm384 = vmor %vm382, %vm383
    %v385 = vsel %vm384, %v377, %v381
    %v386 = vand.u32 2147483647, %v376
    %vm387 = vcmp.eq.f32.partialorder %v386, 8.507059e+37
    %v388 = vand.u32 %v376, 2147483648
    %v389 = vor.u32 1.1754944e-38, %v388
    %v390 = vsel %vm387, %v389, %v385
    %v391 = vmul.f32 %v373, %v390
    %392 = vrot.lane.b32.xlu0 %v133, 112
    %v393 = vpop.permute.xlu0 %392
    %v396 = vsel %vm138, %v391, 0
    %398 = vmatpush.msra.mxu0 0.0
    %399 = vmatpush.msra.mxu0 0.0
    %400 = vmatpush.msra.mxu0 0.0
    %401 = vmatpush.msra.mxu0 0.0
    %402 = vmatpush.msra.mxu0 0.0
    %403 = vmatpush.msra.mxu0 0.0
    %404 = vmatpush.msra.mxu0 0.0
    %405 = vmatpush.msra.mxu0 0.0
    %406 = vmatpush.msra.mxu0 0.0
    %407 = vmatpush.msra.mxu0 0.0
    %408 = vmatpush.msra.mxu0 0.0
    %409 = vmatpush.msra.mxu0 0.0
    %410 = vmatpush.msra.mxu0 0.0
    %411 = vmatpush.msra.mxu0 0.0
    %412 = vmatpush.msra.mxu0 0.0
    %413 = vmatpush.msra.mxu0 %v393
    %414 = vmatmul.f32.gmra.mxu0 %v396
    %v415 = vpop.f32.mrf.mxu0
    %v416 = vadd.f32 0.0, %v415
    %417 = vdwg.mxu0
    %v419 = vsel %vm138, %v416, 0
    %421 = vmatpush.msra.mxu0 0.0
    %422 = vmatpush.msra.mxu0 0.0
    %423 = vmatpush.msra.mxu0 0.0
    %424 = vmatpush.msra.mxu0 0.0
    %425 = vmatpush.msra.mxu0 0.0
    %426 = vmatpush.msra.mxu0 0.0
    %427 = vmatpush.msra.mxu0 0.0
    %428 = vmatpush.msra.mxu0 0.0
    %429 = vmatpush.msra.mxu0 0.0
    %430 = vmatpush.msra.mxu0 0.0
    %431 = vmatpush.msra.mxu0 0.0
    %432 = vmatpush.msra.mxu0 0.0
    %433 = vmatpush.msra.mxu0 0.0
    %434 = vmatpush.msra.mxu0 0.0
    %435 = vmatpush.msra.mxu0 0.0
    %436 = vmatpush.msra.mxu0 %v35
    %437 = vmatmul.f32.gmra.mxu0 %v419
    %v438 = vpop.f32.mrf.mxu0
    %v439 = vadd.f32 0.0, %v438
    %440 = vdwg.mxu0
    %v441 = vadd.f32 %v337, %v439
    %442 = vrot.lane.b32.xlu0 %v73, 104
    %v443 = vpop.permute.xlu0 %442
    %444 = vrot.lane.b32.xlu0 %v103, 104
    %v445 = vpop.permute.xlu0 %444
    %v446 = vsel %vm138, %v443, 0
    %v448 = vsel %vm138, %v445, 0
    %450 = vmatpush.xpose.msra.mxu0 0.0
    %451 = vmatpush.xpose.msra.mxu0 0.0
    %452 = vmatpush.xpose.msra.mxu0 0.0
    %453 = vmatpush.xpose.msra.mxu0 0.0
    %454 = vmatpush.xpose.msra.mxu0 0.0
    %455 = vmatpush.xpose.msra.mxu0 0.0
    %456 = vmatpush.xpose.msra.mxu0 0.0
    %457 = vmatpush.xpose.msra.mxu0 0.0
    %458 = vmatpush.xpose.msra.mxu0 0.0
    %459 = vmatpush.xpose.msra.mxu0 0.0
    %460 = vmatpush.xpose.msra.mxu0 0.0
    %461 = vmatpush.xpose.msra.mxu0 0.0
    %462 = vmatpush.xpose.msra.mxu0 0.0
    %463 = vmatpush.xpose.msra.mxu0 0.0
    %464 = vmatpush.xpose.msra.mxu0 0.0
    %465 = vmatpush.xpose.msra.mxu0 %v448
    %466 = vmatmul.f32.gmra.mxu0 %v446
    %v467 = vpop.f32.mrf.mxu0
    %v468 = vadd.f32 0.0, %v467
    %469 = vdwg.mxu0
    %v470 = vmul.f32 %v468, 0.35355338
    %v471 = vsel %vm138, %v470, -inf
    %472 = vmax.xlane.f32.xlu0 %v471
    %v473 = vpop.xlane.xlu0 %472
    %v474 = vsub.f32 %v470, %v473
    %v475 = vmul.f32 %v474, 1.442695
    %v476 = vpow.pop %v475
    %v477 = vsel %vm138, %v476, 0.0
    %478 = vadd.xlane.f32.xlu0 %v477
    %v479 = vpop.xlane.xlu0 %478
    %v480 = vrcp.pop %v479
    %v481 = vmul.f32 %v479, %v480
    %v482 = vsub.f32 1.0, %v481
    %v483 = vmul.f32 %v480, %v482
    %v484 = vadd.f32 %v480, %v483
    %vm485 = vweird.f32 %v479
    %vm486 = vweird.f32 %v480
    %vm487 = vmor %vm485, %vm486
    %v488 = vsel %vm487, %v480, %v484
    %v489 = vand.u32 2147483647, %v479
    %vm490 = vcmp.eq.f32.partialorder %v489, 8.507059e+37
    %v491 = vand.u32 %v479, 2147483648
    %v492 = vor.u32 1.1754944e-38, %v491
    %v493 = vsel %vm490, %v492, %v488
    %v494 = vmul.f32 %v476, %v493
    %495 = vrot.lane.b32.xlu0 %v133, 104
    %v496 = vpop.permute.xlu0 %495
    %v499 = vsel %vm138, %v494, 0
    %501 = vmatpush.msra.mxu0 0.0
    %502 = vmatpush.msra.mxu0 0.0
    %503 = vmatpush.msra.mxu0 0.0
    %504 = vmatpush.msra.mxu0 0.0
    %505 = vmatpush.msra.mxu0 0.0
    %506 = vmatpush.msra.mxu0 0.0
    %507 = vmatpush.msra.mxu0 0.0
    %508 = vmatpush.msra.mxu0 0.0
    %509 = vmatpush.msra.mxu0 0.0
    %510 = vmatpush.msra.mxu0 0.0
    %511 = vmatpush.msra.mxu0 0.0
    %512 = vmatpush.msra.mxu0 0.0
    %513 = vmatpush.msra.mxu0 0.0
    %514 = vmatpush.msra.mxu0 0.0
    %515 = vmatpush.msra.mxu0 0.0
    %516 = vmatpush.msra.mxu0 %v496
    %517 = vmatmul.f32.gmra.mxu0 %v499
    %v518 = vpop.f32.mrf.mxu0
    %v519 = vadd.f32 0.0, %v518
    %520 = vdwg.mxu0
    %v522 = vsel %vm138, %v519, 0
    %524 = vmatpush.msra.mxu0 0.0
    %525 = vmatpush.msra.mxu0 0.0
    %526 = vmatpush.msra.mxu0 0.0
    %527 = vmatpush.msra.mxu0 0.0
    %528 = vmatpush.msra.mxu0 0.0
    %529 = vmatpush.msra.mxu0 0.0
    %530 = vmatpush.msra.mxu0 0.0
    %531 = vmatpush.msra.mxu0 0.0
    %532 = vmatpush.msra.mxu0 0.0
    %533 = vmatpush.msra.mxu0 0.0
    %534 = vmatpush.msra.mxu0 0.0
    %535 = vmatpush.msra.mxu0 0.0
    %536 = vmatpush.msra.mxu0 0.0
    %537 = vmatpush.msra.mxu0 0.0
    %538 = vmatpush.msra.mxu0 0.0
    %539 = vmatpush.msra.mxu0 %v36
    %540 = vmatmul.f32.gmra.mxu0 %v522
    %v541 = vpop.f32.mrf.mxu0
    %v542 = vadd.f32 0.0, %v541
    %543 = vdwg.mxu0
    %v544 = vadd.f32 %v441, %v542
    %v546 = vsel %vm138, %v76, 0
    %v549 = vsel %vm138, %v106, 0
    %551 = vmatpush.xpose.msra.mxu0 0.0
    %552 = vmatpush.xpose.msra.mxu0 0.0
    %553 = vmatpush.xpose.msra.mxu0 0.0
    %554 = vmatpush.xpose.msra.mxu0 0.0
    %555 = vmatpush.xpose.msra.mxu0 0.0
    %556 = vmatpush.xpose.msra.mxu0 0.0
    %557 = vmatpush.xpose.msra.mxu0 0.0
    %558 = vmatpush.xpose.msra.mxu0 0.0
    %559 = vmatpush.xpose.msra.mxu0 0.0
    %560 = vmatpush.xpose.msra.mxu0 0.0
    %561 = vmatpush.xpose.msra.mxu0 0.0
    %562 = vmatpush.xpose.msra.mxu0 0.0
    %563 = vmatpush.xpose.msra.mxu0 0.0
    %564 = vmatpush.xpose.msra.mxu0 0.0
    %565 = vmatpush.xpose.msra.mxu0 0.0
    %566 = vmatpush.xpose.msra.mxu0 %v549
    %567 = vmatmul.f32.gmra.mxu0 %v546
    %v568 = vpop.f32.mrf.mxu0
    %v569 = vadd.f32 0.0, %v568
    %570 = vdwg.mxu0
    %v571 = vmul.f32 %v569, 0.35355338
    %v572 = vsel %vm138, %v571, -inf
    %573 = vmax.xlane.f32.xlu0 %v572
    %v574 = vpop.xlane.xlu0 %573
    %v575 = vsub.f32 %v571, %v574
    %v576 = vmul.f32 %v575, 1.442695
    %v577 = vpow.pop %v576
    %v578 = vsel %vm138, %v577, 0.0
    %579 = vadd.xlane.f32.xlu0 %v578
    %v580 = vpop.xlane.xlu0 %579
    %v581 = vrcp.pop %v580
    %v582 = vmul.f32 %v580, %v581
    %v583 = vsub.f32 1.0, %v582
    %v584 = vmul.f32 %v581, %v583
    %v585 = vadd.f32 %v581, %v584
    %vm586 = vweird.f32 %v580
    %vm587 = vweird.f32 %v581
    %vm588 = vmor %vm586, %vm587
    %v589 = vsel %vm588, %v581, %v585
    %v590 = vand.u32 2147483647, %v580
    %vm591 = vcmp.eq.f32.partialorder %v590, 8.507059e+37
    %v592 = vand.u32 %v580, 2147483648
    %v593 = vor.u32 1.1754944e-38, %v592
    %v594 = vsel %vm591, %v593, %v589
    %v595 = vmul.f32 %v577, %v594
    %v597 = vsel %vm138, %v595, 0
    %599 = vmatpush.msra.mxu0 0.0
    %600 = vmatpush.msra.mxu0 0.0
    %601 = vmatpush.msra.mxu0 0.0
    %602 = vmatpush.msra.mxu0 0.0
    %603 = vmatpush.msra.mxu0 0.0
    %604 = vmatpush.msra.mxu0 0.0
    %605 = vmatpush.msra.mxu0 0.0
    %606 = vmatpush.msra.mxu0 0.0
    %607 = vmatpush.msra.mxu0 0.0
    %608 = vmatpush.msra.mxu0 0.0
    %609 = vmatpush.msra.mxu0 0.0
    %610 = vmatpush.msra.mxu0 0.0
    %611 = vmatpush.msra.mxu0 0.0
    %612 = vmatpush.msra.mxu0 0.0
    %613 = vmatpush.msra.mxu0 0.0
    %614 = vmatpush.msra.mxu0 %v136
    %615 = vmatmul.f32.gmra.mxu0 %v597
    %v616 = vpop.f32.mrf.mxu0
    %v617 = vadd.f32 0.0, %v616
    %618 = vdwg.mxu0
    %619 = vrot.lane.b32.xlu0 %v76, 120
    %v620 = vpop.permute.xlu0 %619
    %621 = vrot.lane.b32.xlu0 %v106, 120
    %v622 = vpop.permute.xlu0 %621
    %v623 = vsel %vm138, %v620, 0
    %v625 = vsel %vm138, %v622, 0
    %627 = vmatpush.xpose.msra.mxu0 0.0
    %628 = vmatpush.xpose.msra.mxu0 0.0
    %629 = vmatpush.xpose.msra.mxu0 0.0
    %630 = vmatpush.xpose.msra.mxu0 0.0
    %631 = vmatpush.xpose.msra.mxu0 0.0
    %632 = vmatpush.xpose.msra.mxu0 0.0
    %633 = vmatpush.xpose.msra.mxu0 0.0
    %634 = vmatpush.xpose.msra.mxu0 0.0
    %635 = vmatpush.xpose.msra.mxu0 0.0
    %636 = vmatpush.xpose.msra.mxu0 0.0
    %637 = vmatpush.xpose.msra.mxu0 0.0
    %638 = vmatpush.xpose.msra.mxu0 0.0
    %639 = vmatpush.xpose.msra.mxu0 0.0
    %640 = vmatpush.xpose.msra.mxu0 0.0
    %641 = vmatpush.xpose.msra.mxu0 0.0
    %642 = vmatpush.xpose.msra.mxu0 %v625
    %643 = vmatmul.f32.gmra.mxu0 %v623
    %v644 = vpop.f32.mrf.mxu0
    %v645 = vadd.f32 0.0, %v644
    %646 = vdwg.mxu0
    %v647 = vmul.f32 %v645, 0.35355338
    %v648 = vsel %vm138, %v647, -inf
    %649 = vmax.xlane.f32.xlu0 %v648
    %v650 = vpop.xlane.xlu0 %649
    %v651 = vsub.f32 %v647, %v650
    %v652 = vmul.f32 %v651, 1.442695
    %v653 = vpow.pop %v652
    %v654 = vsel %vm138, %v653, 0.0
    %655 = vadd.xlane.f32.xlu0 %v654
    %v656 = vpop.xlane.xlu0 %655
    %v657 = vrcp.pop %v656
    %v658 = vmul.f32 %v656, %v657
    %v659 = vsub.f32 1.0, %v658
    %v660 = vmul.f32 %v657, %v659
    %v661 = vadd.f32 %v657, %v660
    %vm662 = vweird.f32 %v656
    %vm663 = vweird.f32 %v657
    %vm664 = vmor %vm662, %vm663
    %v665 = vsel %vm664, %v657, %v661
    %v666 = vand.u32 2147483647, %v656
    %vm667 = vcmp.eq.f32.partialorder %v666, 8.507059e+37
    %v668 = vand.u32 %v656, 2147483648
    %v669 = vor.u32 1.1754944e-38, %v668
    %v670 = vsel %vm667, %v669, %v665
    %v671 = vmul.f32 %v653, %v670
    %673 = vrot.lane.b32.xlu0 %v136, 120
    %v674 = vpop.permute.xlu0 %673
    %v677 = vsel %vm138, %v671, 0
    %679 = vmatpush.msra.mxu0 0.0
    %680 = vmatpush.msra.mxu0 0.0
    %681 = vmatpush.msra.mxu0 0.0
    %682 = vmatpush.msra.mxu0 0.0
    %683 = vmatpush.msra.mxu0 0.0
    %684 = vmatpush.msra.mxu0 0.0
    %685 = vmatpush.msra.mxu0 0.0
    %686 = vmatpush.msra.mxu0 0.0
    %687 = vmatpush.msra.mxu0 0.0
    %688 = vmatpush.msra.mxu0 0.0
    %689 = vmatpush.msra.mxu0 0.0
    %690 = vmatpush.msra.mxu0 0.0
    %691 = vmatpush.msra.mxu0 0.0
    %692 = vmatpush.msra.mxu0 0.0
    %693 = vmatpush.msra.mxu0 0.0
    %694 = vmatpush.msra.mxu0 %v674
    %695 = vmatmul.f32.gmra.mxu0 %v677
    %v696 = vpop.f32.mrf.mxu0
    %v697 = vadd.f32 0.0, %v696
    %698 = vdwg.mxu0
    %v700 = vsel %vm138, %v697, 0
    %702 = vmatpush.msra.mxu0 0.0
    %703 = vmatpush.msra.mxu0 0.0
    %704 = vmatpush.msra.mxu0 0.0
    %705 = vmatpush.msra.mxu0 0.0
    %706 = vmatpush.msra.mxu0 0.0
    %707 = vmatpush.msra.mxu0 0.0
    %708 = vmatpush.msra.mxu0 0.0
    %709 = vmatpush.msra.mxu0 0.0
    %710 = vmatpush.msra.mxu0 0.0
    %711 = vmatpush.msra.mxu0 0.0
    %712 = vmatpush.msra.mxu0 0.0
    %713 = vmatpush.msra.mxu0 0.0
    %714 = vmatpush.msra.mxu0 0.0
    %715 = vmatpush.msra.mxu0 0.0
    %716 = vmatpush.msra.mxu0 0.0
    %717 = vmatpush.msra.mxu0 %v34
    %718 = vmatmul.f32.gmra.mxu0 %v700
    %v719 = vpop.f32.mrf.mxu0
    %v720 = vadd.f32 0.0, %v719
    %721 = vdwg.mxu0
    %v723 = vsel %vm138, %v617, 0
    %725 = vmatpush.msra.mxu0 0.0
    %726 = vmatpush.msra.mxu0 0.0
    %727 = vmatpush.msra.mxu0 0.0
    %728 = vmatpush.msra.mxu0 0.0
    %729 = vmatpush.msra.mxu0 0.0
    %730 = vmatpush.msra.mxu0 0.0
    %731 = vmatpush.msra.mxu0 0.0
    %732 = vmatpush.msra.mxu0 0.0
    %733 = vmatpush.msra.mxu0 0.0
    %734 = vmatpush.msra.mxu0 0.0
    %735 = vmatpush.msra.mxu0 0.0
    %736 = vmatpush.msra.mxu0 0.0
    %737 = vmatpush.msra.mxu0 0.0
    %738 = vmatpush.msra.mxu0 0.0
    %739 = vmatpush.msra.mxu0 0.0
    %740 = vmatpush.msra.mxu0 %v33
    %741 = vmatmul.f32.gmra.mxu0 %v723
    %v742 = vpop.f32.mrf.mxu0
    %v743 = vadd.f32 %v720, %v742
    %744 = vdwg.mxu0
    %745 = vrot.lane.b32.xlu0 %v76, 112
    %v746 = vpop.permute.xlu0 %745
    %747 = vrot.lane.b32.xlu0 %v106, 112
    %v748 = vpop.permute.xlu0 %747
    %v749 = vsel %vm138, %v746, 0
    %v751 = vsel %vm138, %v748, 0
    %753 = vmatpush.xpose.msra.mxu0 0.0
    %754 = vmatpush.xpose.msra.mxu0 0.0
    %755 = vmatpush.xpose.msra.mxu0 0.0
    %756 = vmatpush.xpose.msra.mxu0 0.0
    %757 = vmatpush.xpose.msra.mxu0 0.0
    %758 = vmatpush.xpose.msra.mxu0 0.0
    %759 = vmatpush.xpose.msra.mxu0 0.0
    %760 = vmatpush.xpose.msra.mxu0 0.0
    %761 = vmatpush.xpose.msra.mxu0 0.0
    %762 = vmatpush.xpose.msra.mxu0 0.0
    %763 = vmatpush.xpose.msra.mxu0 0.0
    %764 = vmatpush.xpose.msra.mxu0 0.0
    %765 = vmatpush.xpose.msra.mxu0 0.0
    %766 = vmatpush.xpose.msra.mxu0 0.0
    %767 = vmatpush.xpose.msra.mxu0 0.0
    %768 = vmatpush.xpose.msra.mxu0 %v751
    %769 = vmatmul.f32.gmra.mxu0 %v749
    %v770 = vpop.f32.mrf.mxu0
    %v771 = vadd.f32 0.0, %v770
    %772 = vdwg.mxu0
    %v773 = vmul.f32 %v771, 0.35355338
    %v774 = vsel %vm138, %v773, -inf
    %775 = vmax.xlane.f32.xlu0 %v774
    %v776 = vpop.xlane.xlu0 %775
    %v777 = vsub.f32 %v773, %v776
    %v778 = vmul.f32 %v777, 1.442695
    %v779 = vpow.pop %v778
    %v780 = vsel %vm138, %v779, 0.0
    %781 = vadd.xlane.f32.xlu0 %v780
    %v782 = vpop.xlane.xlu0 %781
    %v783 = vrcp.pop %v782
    %v784 = vmul.f32 %v782, %v783
    %v785 = vsub.f32 1.0, %v784
    %v786 = vmul.f32 %v783, %v785
    %v787 = vadd.f32 %v783, %v786
    %vm788 = vweird.f32 %v782
    %vm789 = vweird.f32 %v783
    %vm790 = vmor %vm788, %vm789
    %v791 = vsel %vm790, %v783, %v787
    %v792 = vand.u32 2147483647, %v782
    %vm793 = vcmp.eq.f32.partialorder %v792, 8.507059e+37
    %v794 = vand.u32 %v782, 2147483648
    %v795 = vor.u32 1.1754944e-38, %v794
    %v796 = vsel %vm793, %v795, %v791
    %v797 = vmul.f32 %v779, %v796
    %798 = vrot.lane.b32.xlu0 %v136, 112
    %v799 = vpop.permute.xlu0 %798
    %v802 = vsel %vm138, %v797, 0
    %804 = vmatpush.msra.mxu0 0.0
    %805 = vmatpush.msra.mxu0 0.0
    %806 = vmatpush.msra.mxu0 0.0
    %807 = vmatpush.msra.mxu0 0.0
    %808 = vmatpush.msra.mxu0 0.0
    %809 = vmatpush.msra.mxu0 0.0
    %810 = vmatpush.msra.mxu0 0.0
    %811 = vmatpush.msra.mxu0 0.0
    %812 = vmatpush.msra.mxu0 0.0
    %813 = vmatpush.msra.mxu0 0.0
    %814 = vmatpush.msra.mxu0 0.0
    %815 = vmatpush.msra.mxu0 0.0
    %816 = vmatpush.msra.mxu0 0.0
    %817 = vmatpush.msra.mxu0 0.0
    %818 = vmatpush.msra.mxu0 0.0
    %819 = vmatpush.msra.mxu0 %v799
    %820 = vmatmul.f32.gmra.mxu0 %v802
    %v821 = vpop.f32.mrf.mxu0
    %v822 = vadd.f32 0.0, %v821
    %823 = vdwg.mxu0
    %v825 = vsel %vm138, %v822, 0
    %827 = vmatpush.msra.mxu0 0.0
    %828 = vmatpush.msra.mxu0 0.0
    %829 = vmatpush.msra.mxu0 0.0
    %830 = vmatpush.msra.mxu0 0.0
    %831 = vmatpush.msra.mxu0 0.0
    %832 = vmatpush.msra.mxu0 0.0
    %833 = vmatpush.msra.mxu0 0.0
    %834 = vmatpush.msra.mxu0 0.0
    %835 = vmatpush.msra.mxu0 0.0
    %836 = vmatpush.msra.mxu0 0.0
    %837 = vmatpush.msra.mxu0 0.0
    %838 = vmatpush.msra.mxu0 0.0
    %839 = vmatpush.msra.mxu0 0.0
    %840 = vmatpush.msra.mxu0 0.0
    %841 = vmatpush.msra.mxu0 0.0
    %842 = vmatpush.msra.mxu0 %v35
    %843 = vmatmul.f32.gmra.mxu0 %v825
    %v844 = vpop.f32.mrf.mxu0
    %v845 = vadd.f32 0.0, %v844
    %846 = vdwg.mxu0
    %v847 = vadd.f32 %v743, %v845
    %848 = vrot.lane.b32.xlu0 %v76, 104
    %v849 = vpop.permute.xlu0 %848
    %850 = vrot.lane.b32.xlu0 %v106, 104
    %v851 = vpop.permute.xlu0 %850
    %v852 = vsel %vm138, %v849, 0
    %v854 = vsel %vm138, %v851, 0
    %856 = vmatpush.xpose.msra.mxu0 0.0
    %857 = vmatpush.xpose.msra.mxu0 0.0
    %858 = vmatpush.xpose.msra.mxu0 0.0
    %859 = vmatpush.xpose.msra.mxu0 0.0
    %860 = vmatpush.xpose.msra.mxu0 0.0
    %861 = vmatpush.xpose.msra.mxu0 0.0
    %862 = vmatpush.xpose.msra.mxu0 0.0
    %863 = vmatpush.xpose.msra.mxu0 0.0
    %864 = vmatpush.xpose.msra.mxu0 0.0
    %865 = vmatpush.xpose.msra.mxu0 0.0
    %866 = vmatpush.xpose.msra.mxu0 0.0
    %867 = vmatpush.xpose.msra.mxu0 0.0
    %868 = vmatpush.xpose.msra.mxu0 0.0
    %869 = vmatpush.xpose.msra.mxu0 0.0
    %870 = vmatpush.xpose.msra.mxu0 0.0
    %871 = vmatpush.xpose.msra.mxu0 %v854
    %872 = vmatmul.f32.gmra.mxu0 %v852
    %v873 = vpop.f32.mrf.mxu0
    %v874 = vadd.f32 0.0, %v873
    %875 = vdwg.mxu0
    %v876 = vmul.f32 %v874, 0.35355338
    %v877 = vsel %vm138, %v876, -inf
    %878 = vmax.xlane.f32.xlu0 %v877
    %v879 = vpop.xlane.xlu0 %878
    %v880 = vsub.f32 %v876, %v879
    %v881 = vmul.f32 %v880, 1.442695
    %v882 = vpow.pop %v881
    %v883 = vsel %vm138, %v882, 0.0
    %884 = vadd.xlane.f32.xlu0 %v883
    %v885 = vpop.xlane.xlu0 %884
    %v886 = vrcp.pop %v885
    %v887 = vmul.f32 %v885, %v886
    %v888 = vsub.f32 1.0, %v887
    %v889 = vmul.f32 %v886, %v888
    %v890 = vadd.f32 %v886, %v889
    %vm891 = vweird.f32 %v885
    %vm892 = vweird.f32 %v886
    %vm893 = vmor %vm891, %vm892
    %v894 = vsel %vm893, %v886, %v890
    %v895 = vand.u32 2147483647, %v885
    %vm896 = vcmp.eq.f32.partialorder %v895, 8.507059e+37
    %v897 = vand.u32 %v885, 2147483648
    %v898 = vor.u32 1.1754944e-38, %v897
    %v899 = vsel %vm896, %v898, %v894
    %v900 = vmul.f32 %v882, %v899
    %901 = vrot.lane.b32.xlu0 %v136, 104
    %v902 = vpop.permute.xlu0 %901
    %v905 = vsel %vm138, %v900, 0
    %907 = vmatpush.msra.mxu0 0.0
    %908 = vmatpush.msra.mxu0 0.0
    %909 = vmatpush.msra.mxu0 0.0
    %910 = vmatpush.msra.mxu0 0.0
    %911 = vmatpush.msra.mxu0 0.0
    %912 = vmatpush.msra.mxu0 0.0
    %913 = vmatpush.msra.mxu0 0.0
    %914 = vmatpush.msra.mxu0 0.0
    %915 = vmatpush.msra.mxu0 0.0
    %916 = vmatpush.msra.mxu0 0.0
    %917 = vmatpush.msra.mxu0 0.0
    %918 = vmatpush.msra.mxu0 0.0
    %919 = vmatpush.msra.mxu0 0.0
    %920 = vmatpush.msra.mxu0 0.0
    %921 = vmatpush.msra.mxu0 0.0
    %922 = vmatpush.msra.mxu0 %v902
    %923 = vmatmul.f32.gmra.mxu0 %v905
    %v924 = vpop.f32.mrf.mxu0
    %v925 = vadd.f32 0.0, %v924
    %926 = vdwg.mxu0
    %v928 = vsel %vm138, %v925, 0
    %930 = vmatpush.msra.mxu0 0.0
    %931 = vmatpush.msra.mxu0 0.0
    %932 = vmatpush.msra.mxu0 0.0
    %933 = vmatpush.msra.mxu0 0.0
    %934 = vmatpush.msra.mxu0 0.0
    %935 = vmatpush.msra.mxu0 0.0
    %936 = vmatpush.msra.mxu0 0.0
    %937 = vmatpush.msra.mxu0 0.0
    %938 = vmatpush.msra.mxu0 0.0
    %939 = vmatpush.msra.mxu0 0.0
    %940 = vmatpush.msra.mxu0 0.0
    %941 = vmatpush.msra.mxu0 0.0
    %942 = vmatpush.msra.mxu0 0.0
    %943 = vmatpush.msra.mxu0 0.0
    %944 = vmatpush.msra.mxu0 0.0
    %945 = vmatpush.msra.mxu0 %v36
    %946 = vmatmul.f32.gmra.mxu0 %v928
    %v947 = vpop.f32.mrf.mxu0
    %v948 = vadd.f32 0.0, %v947
    %949 = vdwg.mxu0
    %v950 = vadd.f32 %v847, %v948
    %v951 = vperm.slane %v45, 3
    %v952 = vadd.f32 %v544, %v951
    %v953 = vadd.f32 %v950, %v951
    %v954 = vadd.f32 %v952, %v15
    %v955 = vadd.f32 %v953, %v16
    %v956 = vsel %vm48, %v954, 0.0
    %957 = vadd.xlane.f32.xlu0 %v956
    %v958 = vpop.xlane.xlu0 %957
    %v959 = vsel %vm48, %v955, 0.0
    %960 = vadd.xlane.f32.xlu0 %v959
    %v961 = vpop.xlane.xlu0 %960
    %v962 = vrcp.pop 32.0
    %v963 = vmul.f32 32.0, %v962
    %v964 = vsub.f32 1.0, %v963
    %v965 = vmul.f32 %v962, %v964
    %v966 = vadd.f32 %v962, %v965
    %vm967 = vweird.f32 %v962
    %v968 = vsel %vm967, %v962, %v966
    %v969 = vmul.f32 %v958, %v968
    %v970 = vmul.f32 %v961, %v968
    %v971 = vsub.f32 %v954, %v969
    %v972 = vsub.f32 %v955, %v970
    %v973 = vmul.f32 %v971, %v971
    %v974 = vmul.f32 %v972, %v972
    %v975 = vsel %vm48, %v973, 0.0
    %976 = vadd.xlane.f32.xlu0 %v975
    %v977 = vpop.xlane.xlu0 %976
    %v978 = vsel %vm48, %v974, 0.0
    %979 = vadd.xlane.f32.xlu0 %v978
    %v980 = vpop.xlane.xlu0 %979
    %v981 = vmul.f32 %v977, %v968
    %v982 = vmul.f32 %v980, %v968
    %v983 = vadd.f32 %v981, 1e-05
    %v984 = vadd.f32 %v982, 1e-05
    %v985 = vrsqrt.pop %v983
    %v986 = vmul.f32 %v985, %v983
    %v987 = vmul.f32 %v986, %v985
    %v988 = vmul.f32 0.5, %v987
    %v989 = vsub.f32 1.5, %v988
    %v990 = vmul.f32 %v985, %v989
    %vm991 = vweird.f32 %v983
    %vm992 = vweird.f32 %v985
    %vm993 = vmor %vm991, %vm992
    %v994 = vsel %vm993, %v985, %v990
    %v995 = vrsqrt.pop %v984
    %v996 = vmul.f32 %v995, %v984
    %v997 = vmul.f32 %v996, %v995
    %v998 = vmul.f32 0.5, %v997
    %v999 = vsub.f32 1.5, %v998
    %v1000 = vmul.f32 %v995, %v999
    %vm1001 = vweird.f32 %v984
    %vm1002 = vweird.f32 %v995
    %vm1003 = vmor %vm1001, %vm1002
    %v1004 = vsel %vm1003, %v995, %v1000
    %v1005 = vmul.f32 %v971, %v994
    %v1006 = vmul.f32 %v972, %v1004
    %v1007 = vperm.slane %v45, 4
    %v1008 = vmul.f32 %v1005, %v1007
    %v1009 = vmul.f32 %v1006, %v1007
    %v1010 = vperm.slane %v45, 5
    %v1011 = vadd.f32 %v1008, %v1010
    %v1012 = vadd.f32 %v1009, %v1010
    %v1013 = vperm.slane %v45, 6
    %v1015 = vsel %vm48, %v1011, 0
    %v1018 = vsel %vm48, %v1012, 0
    %1020 = vmatpush.msra.mxu0 0.0
    %1021 = vmatpush.msra.mxu0 0.0
    %1022 = vmatpush.msra.mxu0 0.0
    %1023 = vmatpush.msra.mxu0 0.0
    %1024 = vmatpush.msra.mxu0 0.0
    %1025 = vmatpush.msra.mxu0 0.0
    %1026 = vmatpush.msra.mxu0 0.0
    %1027 = vmatpush.msra.mxu0 0.0
    %1028 = vmatpush.msra.mxu0 0.0
    %1029 = vmatpush.msra.mxu0 0.0
    %1030 = vmatpush.msra.mxu0 0.0
    %1031 = vmatpush.msra.mxu0 0.0
    %1032 = vmatpush.msra.mxu0 %v40
    %1033 = vmatpush.msra.mxu0 %v39
    %1034 = vmatpush.msra.mxu0 %v38
    %1035 = vmatpush.msra.mxu0 %v37
    %1036 = vmatmul.f32.gmra.mxu0 %v1015
    %v1037 = vpop.f32.mrf.mxu0
    %v1038 = vadd.f32 %v1013, %v1037
    %1039 = vmatmul.f32.gmra.mxu0 %v1018
    %v1040 = vpop.f32.mrf.mxu0
    %v1041 = vadd.f32 %v1013, %v1040
    %1042 = vdwg.mxu0
    %v1043 = vmul.f32 %v1038, 0.5
    %v1044 = vmul.f32 %v1041, 0.5
    %v1045 = vmul.f32 %v1038, 0.70710677
    %v1046 = vmul.f32 %v1041, 0.70710677
    %v1047 = vmul.f32 %v1045, %v1045
    %v1048 = vmin.f32 16.0, %v1047
    %v1049 = vmul.f32 %v1048, 2.1237322e-06
    %v1050 = vadd.f32 %v1049, 0.00028619796
    %v1051 = vmul.f32 %v1048, %v1050
    %v1052 = vadd.f32 %v1051, 0.0036580483
    %v1053 = vmul.f32 %v1048, %v1052
    %v1054 = vadd.f32 %v1053, 0.05243302
    %v1055 = vmul.f32 %v1048, %v1054
    %v1056 = vadd.f32 %v1055, 0.18741608
    %v1057 = vmul.f32 %v1048, %v1056
    %v1058 = vadd.f32 %v1057, 1.1283791
    %v1059 = vmul.f32 %v1045, %v1058
    %v1060 = vmul.f32 %v1048, 3.8918573e-05
    %v1061 = vadd.f32 %v1060, 0.001143296
    %v1062 = vmul.f32 %v1048, %v1061
    %v1063 = vadd.f32 %v1062, 0.014752088
    %v1064 = vmul.f32 %v1048, %v1063
    %v1065 = vadd.f32 %v1064, 0.112945676
    %v1066 = vmul.f32 %v1048, %v1065
    %v1067 = vadd.f32 %v1066, 0.4994258
    %v1068 = vmul.f32 %v1048, %v1067
    %v1069 = vadd.f32 %v1068, 1.0
    %v1070 = vrcp.pop %v1069
    %v1071 = vmul.f32 %v1069, %v1070
    %v1072 = vsub.f32 1.0, %v1071
    %v1073 = vmul.f32 %v1070, %v1072
    %v1074 = vadd.f32 %v1070, %v1073
    %vm1075 = vweird.f32 %v1069
    %vm1076 = vweird.f32 %v1070
    %vm1077 = vmor %vm1075, %vm1076
    %v1078 = vsel %vm1077, %v1070, %v1074
    %v1079 = vand.u32 2147483647, %v1069
    %vm1080 = vcmp.eq.f32.partialorder %v1079, 8.507059e+37
    %v1081 = vand.u32 %v1069, 2147483648
    %v1082 = vor.u32 1.1754944e-38, %v1081
    %v1083 = vsel %vm1080, %v1082, %v1078
    %v1084 = vmul.f32 %v1059, %v1083
    %v1085 = vmin.f32 %v1084, 1.0
    %v1086 = vmax.f32 %v1085, -1.0
    %v1087 = vmul.f32 %v1046, %v1046
    %v1088 = vmin.f32 16.0, %v1087
    %v1089 = vmul.f32 %v1088, 2.1237322e-06
    %v1090 = vadd.f32 %v1089, 0.00028619796
    %v1091 = vmul.f32 %v1088, %v1090
    %v1092 = vadd.f32 %v1091, 0.0036580483
    %v1093 = vmul.f32 %v1088, %v1092
    %v1094 = vadd.f32 %v1093, 0.05243302
    %v1095 = vmul.f32 %v1088, %v1094
    %v1096 = vadd.f32 %v1095, 0.18741608
    %v1097 = vmul.f32 %v1088, %v1096
    %v1098 = vadd.f32 %v1097, 1.1283791
    %v1099 = vmul.f32 %v1046, %v1098
    %v1100 = vmul.f32 %v1088, 3.8918573e-05
    %v1101 = vadd.f32 %v1100, 0.001143296
    %v1102 = vmul.f32 %v1088, %v1101
    %v1103 = vadd.f32 %v1102, 0.014752088
    %v1104 = vmul.f32 %v1088, %v1103
    %v1105 = vadd.f32 %v1104, 0.112945676
    %v1106 = vmul.f32 %v1088, %v1105
    %v1107 = vadd.f32 %v1106, 0.4994258
    %v1108 = vmul.f32 %v1088, %v1107
    %v1109 = vadd.f32 %v1108, 1.0
    %v1110 = vrcp.pop %v1109
    %v1111 = vmul.f32 %v1109, %v1110
    %v1112 = vsub.f32 1.0, %v1111
    %v1113 = vmul.f32 %v1110, %v1112
    %v1114 = vadd.f32 %v1110, %v1113
    %vm1115 = vweird.f32 %v1109
    %vm1116 = vweird.f32 %v1110
    %vm1117 = vmor %vm1115, %vm1116
    %v1118 = vsel %vm1117, %v1110, %v1114
    %v1119 = vand.u32 2147483647, %v1109
    %vm1120 = vcmp.eq.f32.partialorder %v1119, 8.507059e+37
    %v1121 = vand.u32 %v1109, 2147483648
    %v1122 = vor.u32 1.1754944e-38, %v1121
    %v1123 = vsel %vm1120, %v1122, %v1118
    %v1124 = vmul.f32 %v1099, %v1123
    %v1125 = vmin.f32 %v1124, 1.0
    %v1126 = vmax.f32 %v1125, -1.0
    %v1127 = vadd.f32 %v1086, 1.0
    %v1128 = vadd.f32 %v1126, 1.0
    %v1129 = vmul.f32 %v1043, %v1127
    %v1130 = vmul.f32 %v1044, %v1128
    %v1131 = vperm.slane %v45, 7
    %v1133 = vsel %vm48, %v1129, 0
    %v1136 = vsel %vm48, %v1130, 0
    %1138 = vmatpush.msra.mxu0 0.0
    %1139 = vmatpush.msra.mxu0 0.0
    %1140 = vmatpush.msra.mxu0 0.0
    %1141 = vmatpush.msra.mxu0 0.0
    %1142 = vmatpush.msra.mxu0 0.0
    %1143 = vmatpush.msra.mxu0 0.0
    %1144 = vmatpush.msra.mxu0 0.0
    %1145 = vmatpush.msra.mxu0 0.0
    %1146 = vmatpush.msra.mxu0 0.0
    %1147 = vmatpush.msra.mxu0 0.0
    %1148 = vmatpush.msra.mxu0 0.0
    %1149 = vmatpush.msra.mxu0 0.0
    %1150 = vmatpush.msra.mxu0 %v44
    %1151 = vmatpush.msra.mxu0 %v43
    %1152 = vmatpush.msra.mxu0 %v42
    %1153 = vmatpush.msra.mxu0 %v41
    %1154 = vmatmul.f32.gmra.mxu0 %v1133
    %v1155 = vpop.f32.mrf.mxu0
    %v1156 = vadd.f32 %v1131, %v1155
    %1157 = vmatmul.f32.gmra.mxu0 %v1136
    %v1158 = vpop.f32.mrf.mxu0
    %v1159 = vadd.f32 %v1131, %v1158
    %1160 = vdwg.mxu0
    %v1161 = vadd.f32 %v1156, %v1011
    %v1162 = vadd.f32 %v1159, %v1012
    %v1163 = vsel %vm48, %v1161, 0.0
    %1164 = vadd.xlane.f32.xlu0 %v1163
    %v1165 = vpop.xlane.xlu0 %1164
    %v1166 = vsel %vm48, %v1162, 0.0
    %1167 = vadd.xlane.f32.xlu0 %v1166
    %v1168 = vpop.xlane.xlu0 %1167
    %v1169 = vmul.f32 %v1165, %v968
    %v1170 = vmul.f32 %v1168, %v968
    %v1171 = vsub.f32 %v1161, %v1169
    %v1172 = vsub.f32 %v1162, %v1170
    %v1173 = vmul.f32 %v1171, %v1171
    %v1174 = vmul.f32 %v1172, %v1172
    %v1175 = vsel %vm48, %v1173, 0.0
    %1176 = vadd.xlane.f32.xlu0 %v1175
    %v1177 = vpop.xlane.xlu0 %1176
    %v1178 = vsel %vm48, %v1174, 0.0
    %1179 = vadd.xlane.f32.xlu0 %v1178
    %v1180 = vpop.xlane.xlu0 %1179
    %v1181 = vmul.f32 %v1177, %v968
    %v1182 = vmul.f32 %v1180, %v968
    %v1183 = vadd.f32 %v1181, 1e-05
    %v1184 = vadd.f32 %v1182, 1e-05
    %v1185 = vrsqrt.pop %v1183
    %v1186 = vmul.f32 %v1185, %v1183
    %v1187 = vmul.f32 %v1186, %v1185
    %v1188 = vmul.f32 0.5, %v1187
    %v1189 = vsub.f32 1.5, %v1188
    %v1190 = vmul.f32 %v1185, %v1189
    %vm1191 = vweird.f32 %v1183
    %vm1192 = vweird.f32 %v1185
    %vm1193 = vmor %vm1191, %vm1192
    %v1194 = vsel %vm1193, %v1185, %v1190
    %v1195 = vrsqrt.pop %v1184
    %v1196 = vmul.f32 %v1195, %v1184
    %v1197 = vmul.f32 %v1196, %v1195
    %v1198 = vmul.f32 0.5, %v1197
    %v1199 = vsub.f32 1.5, %v1198
    %v1200 = vmul.f32 %v1195, %v1199
    %vm1201 = vweird.f32 %v1184
    %vm1202 = vweird.f32 %v1195
    %vm1203 = vmor %vm1201, %vm1202
    %v1204 = vsel %vm1203, %v1195, %v1200
    %v1205 = vmul.f32 %v1171, %v1194
    %v1206 = vmul.f32 %v1172, %v1204
    %v1207 = vperm.slane %v46, 0
    %v1208 = vmul.f32 %v1205, %v1207
    %v1209 = vmul.f32 %v1206, %v1207
    %v1210 = vperm.slane %v46, 1
    %v1211 = vadd.f32 %v1208, %v1210
    %v1212 = vadd.f32 %v1209, %v1210
    %1213 = vst.msk [vmem:[#allocation2] sm:$0xff] %vm48, %v1211
    %1214 = vst.msk [vmem:[#allocation2 + $0x8] sm:$0xff] %vm48, %v1212
    // Predicated region
    $region14: #{tpu_custom_call.1} parent=1 // pred_check
      _
    $region15: #{tpu_custom_call.1} parent=1 // pred_check_branch
      %1216 = sbr.rel (0) target = $region17
    $region16: #{tpu_custom_call.1} parent=1 // pred_region
      %1218 = vsyncadd [#allocation3], 0
      %s1219 = sshll.u32 [#allocation2], 4
      %s1220 = int_to_ptr.vmem [resolvable:$true] %s1219
      %s1221 = sshll.u32 %s3, 4
      %s1222 = int_to_ptr.hbm [resolvable:$true] %s1221
      %1227 = dma.vmem_to_hbm [thread:$0]  %s1220, 256, %s1222, [#allocation3], 128, 128, 8
    $region17: #{tpu_custom_call.1} parent=1 // pred_fallthru
      _
    // Predicated region
    $region18: #{tpu_custom_call.1} parent=1 // pred_check
      _
    $region19: #{tpu_custom_call.1} parent=1 // pred_check_branch
      %1229 = sbr.rel (0) target = $region21
    $region20: #{tpu_custom_call.1} parent=1 // pred_region
      %1231 = dma.done [#allocation3], 256
    $region21: #{tpu_custom_call.1} parent=1 // pred_fallthru
      _
    %1232 = vsyncpa [#allocation3], 1

</llo_original>
